<compile_context>
chip_gen: v7x
topology: tpu7x:2x2x1
jax: 0.10.0
libtpu: 0.0.40
codegen_flags: <defaults>
</compile_context>

<pallas_src>
import math

import jax
import jax.numpy as jnp
from jax import lax
from jax.experimental import pallas as pl
from jax.experimental.pallas import tpu as pltpu


def _gru_recurrence_kernel(s0_ref, gi_ref, wh_ref, bhn_ref, st_ref, h_scratch):
    """Sequential GRU recurrence over one time chunk.

    s0_ref : (B, K)        initial hidden state
    gi_ref : (TQ, B, 3K)   precomputed input-side gate pre-activations
                           [xe@Wir + bir + bhr | xe@Wiz + biz + bhz | xe@Win + bin]
    wh_ref : (K, 3K)       concatenated hidden weights [Whr | Whz | Whn]
    bhn_ref: (1, K)        hidden bias of the n gate (must stay inside r*(...))
    st_ref : (TQ, B, K)    hidden states for this chunk (output)
    h_scratch: (B, K)      persistent hidden state carried across grid steps
    """
    # Initialize the recurrent state on the first chunk; the VMEM scratch
    # persists across grid iterations and carries the recurrence.
    @pl.when(pl.program_id(0) == 0)
    def _():
        h_scratch[...] = s0_ref[...]

    k = wh_ref.shape[0]
    tq = gi_ref.shape[0]
    wh = wh_ref[...]          # resident; single small matmul operand per step
    bhn = bhn_ref[...]

    def step(tt, h):
        gi = gi_ref[tt]                                           # (B, 3K)
        # Single fused hidden-side matmul per timestep (1 MXU push).
        hh = jnp.dot(h.astype(wh.dtype), wh,
                     preferred_element_type=jnp.float32)          # (B, 3K)
        r = jax.nn.sigmoid(gi[:, :k] + hh[:, :k])
        z = jax.nn.sigmoid(gi[:, k:2 * k] + hh[:, k:2 * k])
        n = jnp.tanh(gi[:, 2 * k:] + r * (hh[:, 2 * k:] + bhn))
        h_new = (1.0 - z) * n + z * h                             # dropout=0 -> identity
        st_ref[tt] = h_new          # stays in the VMEM output block until chunk writeback
        return h_new

    h_final = lax.fori_loop(0, tq, step, h_scratch[...], unroll=True)
    h_scratch[...] = h_final


def mimo_forward(params, inputs, state0=None, *, time_chunk=32,
                 matmul_dtype=jnp.float32):
    """inputs: (B, S, k_in) float32, PyTorch convention. Returns (outputs, states)."""
    B, S, k_in = inputs.shape
    k_state = params["we"].shape[1]
    k_out = params["wly"].shape[1]

    x = inputs.astype(jnp.float32)
    if state0 is None:
        state0 = jnp.broadcast_to(params["state0"][None, :], (B, k_state))
    state0 = state0.astype(jnp.float32)

    # ---- pack / fold parameters (nn.GRUCell gate order: r, z, n) ----------
    wi_cat = jnp.concatenate([params["wir"], params["wiz"], params["win"]], axis=1)  # (k, 3k)
    bi_cat = jnp.concatenate([params["bir"] + params["bhr"],      # fold bhr into bir
                              params["biz"] + params["bhz"],      # fold bhz into biz
                              params["bin"]], axis=1)             # (1, 3k)
    wh_cat = jnp.concatenate([params["whr"], params["whz"], params["whn"]],
                             axis=1).astype(matmul_dtype)         # (k, 3k)
    bhn = params["bhn"]                                           # (1, k)

    # ---- pad batch up to the 8-sublane granularity -------------------------
    b_pad = ((B + 7) // 8) * 8
    if b_pad != B:
        x = jnp.pad(x, ((0, b_pad - B), (0, 0), (0, 0)))
        state0 = jnp.pad(state0, ((0, b_pad - B), (0, 0)))

    # ---- hoisted, fully parallel precompute (one big MXU-dense matmul) -----
    # (The review explicitly allows doing these batched projections in XLA;
    #  only the serial recurrence needs a Pallas kernel.)
    x_tm = jnp.transpose(x, (1, 0, 2))                            # (S, B, k_in)
    xe = jnp.tanh(x_tm.reshape(S * b_pad, k_in) @ params["we"] + params["be"])
    gi = (xe @ wi_cat + bi_cat).reshape(S, b_pad, 3 * k_state)    # f32

    # ---- pad time to a multiple of the chunk size ---------------------------
    tq = min(time_chunk, S)
    s_pad = ((S + tq - 1) // tq) * tq
    if s_pad != S:
        gi = jnp.pad(gi, ((0, s_pad - S), (0, 0), (0, 0)))

    grid = (s_pad // tq,)

    st_tm = pl.pallas_call(
        _gru_recurrence_kernel,
        grid_spec=pltpu.PrefetchScalarGridSpec(
            num_scalar_prefetch=0,
            grid=grid,
            in_specs=[
                pl.BlockSpec((b_pad, k_state), lambda c: (0, 0)),            # state0
                pl.BlockSpec((tq, b_pad, 3 * k_state), lambda c: (c, 0, 0)),  # gi (time-chunked)
                pl.BlockSpec((k_state, 3 * k_state), lambda c: (0, 0)),       # Wh_cat
                pl.BlockSpec((1, k_state), lambda c: (0, 0)),                 # bhn
            ],
            out_specs=pl.BlockSpec((tq, b_pad, k_state), lambda c: (c, 0, 0)),
            scratch_shapes=[pltpu.VMEM((b_pad, k_state), jnp.float32)],
        ),
        out_shape=jax.ShapeDtypeStruct((s_pad, b_pad, k_state), jnp.float32),
        compiler_params=pltpu.CompilerParams(
            # Recurrence: the time-chunk axis is strictly sequential.
            dimension_semantics=("arbitrary",),
        ),
    )(state0, gi, wh_cat, bhn)

    # ---- strip padding, deferred MXU-dense output projection ---------------
    st_tm = st_tm[:S, :B, :]                                      # (S, B, k_state)
    states = jnp.transpose(st_tm, (1, 0, 2))                      # (B, S, k_state)
    outputs = states @ params["wly"]                              # (B, S, k_out), Ly has no bias
    return outputs, states


def mimo_reference(params, inputs, state0=None):
    """Pure-JAX reference implementation (mirrors PyTorch MIMO.forward)."""
    B, S, _ = inputs.shape
    k_state = params["we"].shape[1]
    h = (jnp.broadcast_to(params["state0"][None, :], (B, k_state))
         if state0 is None else state0)
    ys, hs = [], []
    for i in range(S):
        x = inputs[:, i, :]
        xe = jnp.tanh(x @ params["we"] + params["be"])
        r = jax.nn.sigmoid(xe @ params["wir"] + params["bir"]
                           + h @ params["whr"] + params["bhr"])
        z = jax.nn.sigmoid(xe @ params["wiz"] + params["biz"]
                           + h @ params["whz"] + params["bhz"])
        n = jnp.tanh(xe @ params["win"] + params["bin"]
                     + r * (h @ params["whn"] + params["bhn"]))
        h = (1.0 - z) * n + z * h
        ys.append(h @ params["wly"])
        hs.append(h)
    return jnp.stack(ys, axis=1), jnp.stack(hs, axis=1)


def init_params(key, k_in, k_out, k_state):
    """Deterministic init mirroring GRUCell.init_params: U(-stdv, stdv), stdv=1/sqrt(k_state).
    state0 is initialized to zeros as in MIMO.__init__. Weights are stored pre-transposed
    ((in, out) layout) so matmuls are plain `x @ W`."""
    stdv = 1.0 / math.sqrt(k_state)
    names_shapes = [
        ("we", (k_in, k_state)), ("be", (1, k_state)),
        ("wir", (k_state, k_state)), ("wiz", (k_state, k_state)), ("win", (k_state, k_state)),
        ("bir", (1, k_state)), ("biz", (1, k_state)), ("bin", (1, k_state)),
        ("whr", (k_state, k_state)), ("whz", (k_state, k_state)), ("whn", (k_state, k_state)),
        ("bhr", (1, k_state)), ("bhz", (1, k_state)), ("bhn", (1, k_state)),
        ("wly", (k_state, k_out)),
    ]
    params = {}
    keys = jax.random.split(key, len(names_shapes))
    for (name, shape), k in zip(names_shapes, keys):
        params[name] = jax.random.uniform(
            k, shape, dtype=jnp.float32, minval=-stdv, maxval=stdv)
    params["state0"] = jnp.zeros((k_state,), dtype=jnp.float32)
    return params


if __name__ == "__main__":
    B, S, K_IN, K_STATE, K_OUT = 2, 8, 4, 32, 4

    key = jax.random.PRNGKey(0)
    pkey, xkey = jax.random.split(key)
    params = init_params(pkey, K_IN, K_OUT, K_STATE)
    inputs = jax.random.normal(xkey, (B, S, K_IN), dtype=jnp.float32)

    outputs, states = mimo_forward(params, inputs)
    outputs = jax.block_until_ready(outputs)
    states = jax.block_until_ready(states)

    assert outputs.shape == (B, S, K_OUT)
    assert states.shape == (B, S, K_STATE)

    ref_out, ref_st = mimo_reference(params, inputs)
    assert jnp.allclose(outputs, ref_out, atol=5e-5, rtol=5e-5)
    assert jnp.allclose(states, ref_st, atol=5e-5, rtol=5e-5)

    print("KERNEL_OK")
</pallas_src>

<mosaic_0001>
module attributes {stable_mosaic.version = 11 : i64} {
  func.func @_gru_recurrence_kernel(%arg0: i32, %arg1: memref<8x32xf32, #tpu.memory_space<vmem>>, %arg2: memref<8x8x96xf32, #tpu.memory_space<vmem>>, %arg3: memref<32x96xf32, #tpu.memory_space<vmem>>, %arg4: memref<1x32xf32, #tpu.memory_space<vmem>>, %arg5: memref<8x8x32xf32, #tpu.memory_space<vmem>>, %arg6: memref<8x32xf32, #tpu.memory_space<vmem>>) attributes {dimension_semantics = [#tpu.dimension_semantics<arbitrary>], iteration_bounds = array<i64: 1>, scalar_prefetch = 0 : i64, scratch_operands = 1 : i64, tpu.core_type = #tpu.core_type<tc>, window_params = [{pipeline_mode = #tpu.pipeline_mode<synchronous>, transform_indices = @transform_0, window_bounds = array<i64: 8, 32>}, {transform_indices = @transform_1, window_bounds = array<i64: 8, 8, 96>}, {pipeline_mode = #tpu.pipeline_mode<synchronous>, transform_indices = @transform_2, window_bounds = array<i64: 32, 96>}, {pipeline_mode = #tpu.pipeline_mode<synchronous>, transform_indices = @transform_3, window_bounds = array<i64: 1, 32>}, {transform_indices = @transform_4, window_bounds = array<i64: 8, 8, 32>}]} {
    %c0_i32 = arith.constant 0 : i32
    %0 = arith.cmpi eq, %arg0, %c0_i32 : i32
    %1 = arith.extui %0 : i1 to i32
    %c0_i32_0 = arith.constant 0 : i32
    %2 = arith.cmpi ne, %1, %c0_i32_0 : i32
    scf.if %2 {
      %c0_72 = arith.constant 0 : index
      %c0_73 = arith.constant 0 : index
      %295 = vector.load %arg1[%c0_72, %c0_73] : memref<8x32xf32, #tpu.memory_space<vmem>>, vector<8x32xf32>
      %c0_74 = arith.constant 0 : index
      %c0_75 = arith.constant 0 : index
      %296 = vector.load %arg6[%c0_74, %c0_75] : memref<8x32xf32, #tpu.memory_space<vmem>>, vector<8x32xf32>
      tpu.vector_store %arg6[%c0_74, %c0_75], %295 {strides = array<i32>} : memref<8x32xf32, #tpu.memory_space<vmem>>, vector<8x32xf32>,
    } else {
    }
    %c0 = arith.constant 0 : index
    %c0_1 = arith.constant 0 : index
    %3 = vector.load %arg3[%c0, %c0_1] : memref<32x96xf32, #tpu.memory_space<vmem>>, vector<32x96xf32>
    %c0_2 = arith.constant 0 : index
    %c0_3 = arith.constant 0 : index
    %4 = vector.load %arg4[%c0_2, %c0_3] : memref<1x32xf32, #tpu.memory_space<vmem>>, vector<1x32xf32>
    %c0_4 = arith.constant 0 : index
    %c0_5 = arith.constant 0 : index
    %5 = vector.load %arg6[%c0_4, %c0_5] : memref<8x32xf32, #tpu.memory_space<vmem>>, vector<8x32xf32>
    %c0_i32_6 = arith.constant 0 : i32
    %6 = arith.index_cast %c0_i32_6 : i32 to index
    %c0_7 = arith.constant 0 : index
    %c0_8 = arith.constant 0 : index
    %7 = vector.load %arg2[%6, %c0_7, %c0_8] : memref<8x8x96xf32, #tpu.memory_space<vmem>>, vector<1x8x96xf32>
    %8 = vector.shape_cast %7 : vector<1x8x96xf32> to vector<8x96xf32>
    %cst = arith.constant dense<0.000000e+00> : vector<8x96xf32>
    %9 = tpu.matmul %5, %3, %cst {dimension_numbers = #tpu.dot_dimension_numbers<[1], [0], [0], [1], [0, 0, 1, 1], [], []>} : vector<8x32xf32>, vector<32x96xf32>, vector<8x96xf32> -> vector<8x96xf32>
    %10 = vector.extract_strided_slice %8 {offsets = [0, 0], sizes = [8, 32], strides = [1, 1]} : vector<8x96xf32> to vector<8x32xf32>
    %11 = vector.extract_strided_slice %9 {offsets = [0, 0], sizes = [8, 32], strides = [1, 1]} : vector<8x96xf32> to vector<8x32xf32>
    %12 = arith.addf %10, %11 : vector<8x32xf32>
    %13 = arith.negf %12 : vector<8x32xf32>
    %14 = math.exp %13 : vector<8x32xf32>
    %cst_9 = arith.constant 1.000000e+00 : f32
    %15 = vector.broadcast %cst_9 : f32 to vector<8x32xf32>
    %16 = arith.addf %15, %14 : vector<8x32xf32>
    %17 = arith.divf %15, %16 : vector<8x32xf32>
    %18 = vector.extract_strided_slice %8 {offsets = [0, 32], sizes = [8, 32], strides = [1, 1]} : vector<8x96xf32> to vector<8x32xf32>
    %19 = vector.extract_strided_slice %9 {offsets = [0, 32], sizes = [8, 32], strides = [1, 1]} : vector<8x96xf32> to vector<8x32xf32>
    %20 = arith.addf %18, %19 : vector<8x32xf32>
    %21 = arith.negf %20 : vector<8x32xf32>
    %22 = math.exp %21 : vector<8x32xf32>
    %cst_10 = arith.constant 1.000000e+00 : f32
    %23 = vector.broadcast %cst_10 : f32 to vector<8x32xf32>
    %24 = arith.addf %23, %22 : vector<8x32xf32>
    %25 = arith.divf %23, %24 : vector<8x32xf32>
    %26 = vector.extract_strided_slice %8 {offsets = [0, 64], sizes = [8, 32], strides = [1, 1]} : vector<8x96xf32> to vector<8x32xf32>
    %27 = vector.extract_strided_slice %9 {offsets = [0, 64], sizes = [8, 32], strides = [1, 1]} : vector<8x96xf32> to vector<8x32xf32>
    %28 = vector.broadcast %4 : vector<1x32xf32> to vector<8x32xf32>
    %29 = arith.addf %27, %28 : vector<8x32xf32>
    %30 = arith.mulf %17, %29 : vector<8x32xf32>
    %31 = arith.addf %26, %30 : vector<8x32xf32>
    %32 = math.tanh %31 : vector<8x32xf32>
    %cst_11 = arith.constant 1.000000e+00 : f32
    %33 = vector.broadcast %cst_11 : f32 to vector<8x32xf32>
    %34 = arith.subf %33, %25 : vector<8x32xf32>
    %35 = arith.mulf %34, %32 : vector<8x32xf32>
    %36 = arith.mulf %25, %5 : vector<8x32xf32>
    %37 = arith.addf %35, %36 : vector<8x32xf32>
    %38 = arith.index_cast %c0_i32_6 : i32 to index
    %c0_12 = arith.constant 0 : index
    %c0_13 = arith.constant 0 : index
    %39 = vector.load %arg5[%38, %c0_12, %c0_13] : memref<8x8x32xf32, #tpu.memory_space<vmem>>, vector<1x8x32xf32>
    %40 = vector.shape_cast %39 : vector<1x8x32xf32> to vector<8x32xf32>
    %41 = vector.shape_cast %37 : vector<8x32xf32> to vector<1x8x32xf32>
    tpu.vector_store %arg5[%38, %c0_12, %c0_13], %41 {strides = array<i32>} : memref<8x8x32xf32, #tpu.memory_space<vmem>>, vector<1x8x32xf32>,
    %c1_i32 = arith.constant 1 : i32
    %42 = arith.index_cast %c1_i32 : i32 to index
    %c0_14 = arith.constant 0 : index
    %c0_15 = arith.constant 0 : index
    %43 = vector.load %arg2[%42, %c0_14, %c0_15] : memref<8x8x96xf32, #tpu.memory_space<vmem>>, vector<1x8x96xf32>
    %44 = vector.shape_cast %43 : vector<1x8x96xf32> to vector<8x96xf32>
    %cst_16 = arith.constant dense<0.000000e+00> : vector<8x96xf32>
    %45 = tpu.matmul %37, %3, %cst_16 {dimension_numbers = #tpu.dot_dimension_numbers<[1], [0], [0], [1], [0, 0, 1, 1], [], []>} : vector<8x32xf32>, vector<32x96xf32>, vector<8x96xf32> -> vector<8x96xf32>
    %46 = vector.extract_strided_slice %44 {offsets = [0, 0], sizes = [8, 32], strides = [1, 1]} : vector<8x96xf32> to vector<8x32xf32>
    %47 = vector.extract_strided_slice %45 {offsets = [0, 0], sizes = [8, 32], strides = [1, 1]} : vector<8x96xf32> to vector<8x32xf32>
    %48 = arith.addf %46, %47 : vector<8x32xf32>
    %49 = arith.negf %48 : vector<8x32xf32>
    %50 = math.exp %49 : vector<8x32xf32>
    %cst_17 = arith.constant 1.000000e+00 : f32
    %51 = vector.broadcast %cst_17 : f32 to vector<8x32xf32>
    %52 = arith.addf %51, %50 : vector<8x32xf32>
    %53 = arith.divf %51, %52 : vector<8x32xf32>
    %54 = vector.extract_strided_slice %44 {offsets = [0, 32], sizes = [8, 32], strides = [1, 1]} : vector<8x96xf32> to vector<8x32xf32>
    %55 = vector.extract_strided_slice %45 {offsets = [0, 32], sizes = [8, 32], strides = [1, 1]} : vector<8x96xf32> to vector<8x32xf32>
    %56 = arith.addf %54, %55 : vector<8x32xf32>
    %57 = arith.negf %56 : vector<8x32xf32>
    %58 = math.exp %57 : vector<8x32xf32>
    %cst_18 = arith.constant 1.000000e+00 : f32
    %59 = vector.broadcast %cst_18 : f32 to vector<8x32xf32>
    %60 = arith.addf %59, %58 : vector<8x32xf32>
    %61 = arith.divf %59, %60 : vector<8x32xf32>
    %62 = vector.extract_strided_slice %44 {offsets = [0, 64], sizes = [8, 32], strides = [1, 1]} : vector<8x96xf32> to vector<8x32xf32>
    %63 = vector.extract_strided_slice %45 {offsets = [0, 64], sizes = [8, 32], strides = [1, 1]} : vector<8x96xf32> to vector<8x32xf32>
    %64 = vector.broadcast %4 : vector<1x32xf32> to vector<8x32xf32>
    %65 = arith.addf %63, %64 : vector<8x32xf32>
    %66 = arith.mulf %53, %65 : vector<8x32xf32>
    %67 = arith.addf %62, %66 : vector<8x32xf32>
    %68 = math.tanh %67 : vector<8x32xf32>
    %cst_19 = arith.constant 1.000000e+00 : f32
    %69 = vector.broadcast %cst_19 : f32 to vector<8x32xf32>
    %70 = arith.subf %69, %61 : vector<8x32xf32>
    %71 = arith.mulf %70, %68 : vector<8x32xf32>
    %72 = arith.mulf %61, %37 : vector<8x32xf32>
    %73 = arith.addf %71, %72 : vector<8x32xf32>
    %74 = arith.index_cast %c1_i32 : i32 to index
    %c0_20 = arith.constant 0 : index
    %c0_21 = arith.constant 0 : index
    %75 = vector.load %arg5[%74, %c0_20, %c0_21] : memref<8x8x32xf32, #tpu.memory_space<vmem>>, vector<1x8x32xf32>
    %76 = vector.shape_cast %75 : vector<1x8x32xf32> to vector<8x32xf32>
    %77 = vector.shape_cast %73 : vector<8x32xf32> to vector<1x8x32xf32>
    tpu.vector_store %arg5[%74, %c0_20, %c0_21], %77 {strides = array<i32>} : memref<8x8x32xf32, #tpu.memory_space<vmem>>, vector<1x8x32xf32>,
    %c2_i32 = arith.constant 2 : i32
    %78 = arith.index_cast %c2_i32 : i32 to index
    %c0_22 = arith.constant 0 : index
    %c0_23 = arith.constant 0 : index
    %79 = vector.load %arg2[%78, %c0_22, %c0_23] : memref<8x8x96xf32, #tpu.memory_space<vmem>>, vector<1x8x96xf32>
    %80 = vector.shape_cast %79 : vector<1x8x96xf32> to vector<8x96xf32>
    %cst_24 = arith.constant dense<0.000000e+00> : vector<8x96xf32>
    %81 = tpu.matmul %73, %3, %cst_24 {dimension_numbers = #tpu.dot_dimension_numbers<[1], [0], [0], [1], [0, 0, 1, 1], [], []>} : vector<8x32xf32>, vector<32x96xf32>, vector<8x96xf32> -> vector<8x96xf32>
    %82 = vector.extract_strided_slice %80 {offsets = [0, 0], sizes = [8, 32], strides = [1, 1]} : vector<8x96xf32> to vector<8x32xf32>
    %83 = vector.extract_strided_slice %81 {offsets = [0, 0], sizes = [8, 32], strides = [1, 1]} : vector<8x96xf32> to vector<8x32xf32>
    %84 = arith.addf %82, %83 : vector<8x32xf32>
    %85 = arith.negf %84 : vector<8x32xf32>
    %86 = math.exp %85 : vector<8x32xf32>
    %cst_25 = arith.constant 1.000000e+00 : f32
    %87 = vector.broadcast %cst_25 : f32 to vector<8x32xf32>
    %88 = arith.addf %87, %86 : vector<8x32xf32>
    %89 = arith.divf %87, %88 : vector<8x32xf32>
    %90 = vector.extract_strided_slice %80 {offsets = [0, 32], sizes = [8, 32], strides = [1, 1]} : vector<8x96xf32> to vector<8x32xf32>
    %91 = vector.extract_strided_slice %81 {offsets = [0, 32], sizes = [8, 32], strides = [1, 1]} : vector<8x96xf32> to vector<8x32xf32>
    %92 = arith.addf %90, %91 : vector<8x32xf32>
    %93 = arith.negf %92 : vector<8x32xf32>
    %94 = math.exp %93 : vector<8x32xf32>
    %cst_26 = arith.constant 1.000000e+00 : f32
    %95 = vector.broadcast %cst_26 : f32 to vector<8x32xf32>
    %96 = arith.addf %95, %94 : vector<8x32xf32>
    %97 = arith.divf %95, %96 : vector<8x32xf32>
    %98 = vector.extract_strided_slice %80 {offsets = [0, 64], sizes = [8, 32], strides = [1, 1]} : vector<8x96xf32> to vector<8x32xf32>
    %99 = vector.extract_strided_slice %81 {offsets = [0, 64], sizes = [8, 32], strides = [1, 1]} : vector<8x96xf32> to vector<8x32xf32>
    %100 = vector.broadcast %4 : vector<1x32xf32> to vector<8x32xf32>
    %101 = arith.addf %99, %100 : vector<8x32xf32>
    %102 = arith.mulf %89, %101 : vector<8x32xf32>
    %103 = arith.addf %98, %102 : vector<8x32xf32>
    %104 = math.tanh %103 : vector<8x32xf32>
    %cst_27 = arith.constant 1.000000e+00 : f32
    %105 = vector.broadcast %cst_27 : f32 to vector<8x32xf32>
    %106 = arith.subf %105, %97 : vector<8x32xf32>
    %107 = arith.mulf %106, %104 : vector<8x32xf32>
    %108 = arith.mulf %97, %73 : vector<8x32xf32>
    %109 = arith.addf %107, %108 : vector<8x32xf32>
    %110 = arith.index_cast %c2_i32 : i32 to index
    %c0_28 = arith.constant 0 : index
    %c0_29 = arith.constant 0 : index
    %111 = vector.load %arg5[%110, %c0_28, %c0_29] : memref<8x8x32xf32, #tpu.memory_space<vmem>>, vector<1x8x32xf32>
    %112 = vector.shape_cast %111 : vector<1x8x32xf32> to vector<8x32xf32>
    %113 = vector.shape_cast %109 : vector<8x32xf32> to vector<1x8x32xf32>
    tpu.vector_store %arg5[%110, %c0_28, %c0_29], %113 {strides = array<i32>} : memref<8x8x32xf32, #tpu.memory_space<vmem>>, vector<1x8x32xf32>,
    %c3_i32 = arith.constant 3 : i32
    %114 = arith.index_cast %c3_i32 : i32 to index
    %c0_30 = arith.constant 0 : index
    %c0_31 = arith.constant 0 : index
    %115 = vector.load %arg2[%114, %c0_30, %c0_31] : memref<8x8x96xf32, #tpu.memory_space<vmem>>, vector<1x8x96xf32>
    %116 = vector.shape_cast %115 : vector<1x8x96xf32> to vector<8x96xf32>
    %cst_32 = arith.constant dense<0.000000e+00> : vector<8x96xf32>
    %117 = tpu.matmul %109, %3, %cst_32 {dimension_numbers = #tpu.dot_dimension_numbers<[1], [0], [0], [1], [0, 0, 1, 1], [], []>} : vector<8x32xf32>, vector<32x96xf32>, vector<8x96xf32> -> vector<8x96xf32>
    %118 = vector.extract_strided_slice %116 {offsets = [0, 0], sizes = [8, 32], strides = [1, 1]} : vector<8x96xf32> to vector<8x32xf32>
    %119 = vector.extract_strided_slice %117 {offsets = [0, 0], sizes = [8, 32], strides = [1, 1]} : vector<8x96xf32> to vector<8x32xf32>
    %120 = arith.addf %118, %119 : vector<8x32xf32>
    %121 = arith.negf %120 : vector<8x32xf32>
    %122 = math.exp %121 : vector<8x32xf32>
    %cst_33 = arith.constant 1.000000e+00 : f32
    %123 = vector.broadcast %cst_33 : f32 to vector<8x32xf32>
    %124 = arith.addf %123, %122 : vector<8x32xf32>
    %125 = arith.divf %123, %124 : vector<8x32xf32>
    %126 = vector.extract_strided_slice %116 {offsets = [0, 32], sizes = [8, 32], strides = [1, 1]} : vector<8x96xf32> to vector<8x32xf32>
    %127 = vector.extract_strided_slice %117 {offsets = [0, 32], sizes = [8, 32], strides = [1, 1]} : vector<8x96xf32> to vector<8x32xf32>
    %128 = arith.addf %126, %127 : vector<8x32xf32>
    %129 = arith.negf %128 : vector<8x32xf32>
    %130 = math.exp %129 : vector<8x32xf32>
    %cst_34 = arith.constant 1.000000e+00 : f32
    %131 = vector.broadcast %cst_34 : f32 to vector<8x32xf32>
    %132 = arith.addf %131, %130 : vector<8x32xf32>
    %133 = arith.divf %131, %132 : vector<8x32xf32>
    %134 = vector.extract_strided_slice %116 {offsets = [0, 64], sizes = [8, 32], strides = [1, 1]} : vector<8x96xf32> to vector<8x32xf32>
    %135 = vector.extract_strided_slice %117 {offsets = [0, 64], sizes = [8, 32], strides = [1, 1]} : vector<8x96xf32> to vector<8x32xf32>
    %136 = vector.broadcast %4 : vector<1x32xf32> to vector<8x32xf32>
    %137 = arith.addf %135, %136 : vector<8x32xf32>
    %138 = arith.mulf %125, %137 : vector<8x32xf32>
    %139 = arith.addf %134, %138 : vector<8x32xf32>
    %140 = math.tanh %139 : vector<8x32xf32>
    %cst_35 = arith.constant 1.000000e+00 : f32
    %141 = vector.broadcast %cst_35 : f32 to vector<8x32xf32>
    %142 = arith.subf %141, %133 : vector<8x32xf32>
    %143 = arith.mulf %142, %140 : vector<8x32xf32>
    %144 = arith.mulf %133, %109 : vector<8x32xf32>
    %145 = arith.addf %143, %144 : vector<8x32xf32>
    %146 = arith.index_cast %c3_i32 : i32 to index
    %c0_36 = arith.constant 0 : index
    %c0_37 = arith.constant 0 : index
    %147 = vector.load %arg5[%146, %c0_36, %c0_37] : memref<8x8x32xf32, #tpu.memory_space<vmem>>, vector<1x8x32xf32>
    %148 = vector.shape_cast %147 : vector<1x8x32xf32> to vector<8x32xf32>
    %149 = vector.shape_cast %145 : vector<8x32xf32> to vector<1x8x32xf32>
    tpu.vector_store %arg5[%146, %c0_36, %c0_37], %149 {strides = array<i32>} : memref<8x8x32xf32, #tpu.memory_space<vmem>>, vector<1x8x32xf32>,
    %c4_i32 = arith.constant 4 : i32
    %150 = arith.index_cast %c4_i32 : i32 to index
    %c0_38 = arith.constant 0 : index
    %c0_39 = arith.constant 0 : index
    %151 = vector.load %arg2[%150, %c0_38, %c0_39] : memref<8x8x96xf32, #tpu.memory_space<vmem>>, vector<1x8x96xf32>
    %152 = vector.shape_cast %151 : vector<1x8x96xf32> to vector<8x96xf32>
    %cst_40 = arith.constant dense<0.000000e+00> : vector<8x96xf32>
    %153 = tpu.matmul %145, %3, %cst_40 {dimension_numbers = #tpu.dot_dimension_numbers<[1], [0], [0], [1], [0, 0, 1, 1], [], []>} : vector<8x32xf32>, vector<32x96xf32>, vector<8x96xf32> -> vector<8x96xf32>
    %154 = vector.extract_strided_slice %152 {offsets = [0, 0], sizes = [8, 32], strides = [1, 1]} : vector<8x96xf32> to vector<8x32xf32>
    %155 = vector.extract_strided_slice %153 {offsets = [0, 0], sizes = [8, 32], strides = [1, 1]} : vector<8x96xf32> to vector<8x32xf32>
    %156 = arith.addf %154, %155 : vector<8x32xf32>
    %157 = arith.negf %156 : vector<8x32xf32>
    %158 = math.exp %157 : vector<8x32xf32>
    %cst_41 = arith.constant 1.000000e+00 : f32
    %159 = vector.broadcast %cst_41 : f32 to vector<8x32xf32>
    %160 = arith.addf %159, %158 : vector<8x32xf32>
    %161 = arith.divf %159, %160 : vector<8x32xf32>
    %162 = vector.extract_strided_slice %152 {offsets = [0, 32], sizes = [8, 32], strides = [1, 1]} : vector<8x96xf32> to vector<8x32xf32>
    %163 = vector.extract_strided_slice %153 {offsets = [0, 32], sizes = [8, 32], strides = [1, 1]} : vector<8x96xf32> to vector<8x32xf32>
    %164 = arith.addf %162, %163 : vector<8x32xf32>
    %165 = arith.negf %164 : vector<8x32xf32>
    %166 = math.exp %165 : vector<8x32xf32>
    %cst_42 = arith.constant 1.000000e+00 : f32
    %167 = vector.broadcast %cst_42 : f32 to vector<8x32xf32>
    %168 = arith.addf %167, %166 : vector<8x32xf32>
    %169 = arith.divf %167, %168 : vector<8x32xf32>
    %170 = vector.extract_strided_slice %152 {offsets = [0, 64], sizes = [8, 32], strides = [1, 1]} : vector<8x96xf32> to vector<8x32xf32>
    %171 = vector.extract_strided_slice %153 {offsets = [0, 64], sizes = [8, 32], strides = [1, 1]} : vector<8x96xf32> to vector<8x32xf32>
    %172 = vector.broadcast %4 : vector<1x32xf32> to vector<8x32xf32>
    %173 = arith.addf %171, %172 : vector<8x32xf32>
    %174 = arith.mulf %161, %173 : vector<8x32xf32>
    %175 = arith.addf %170, %174 : vector<8x32xf32>
    %176 = math.tanh %175 : vector<8x32xf32>
    %cst_43 = arith.constant 1.000000e+00 : f32
    %177 = vector.broadcast %cst_43 : f32 to vector<8x32xf32>
    %178 = arith.subf %177, %169 : vector<8x32xf32>
    %179 = arith.mulf %178, %176 : vector<8x32xf32>
    %180 = arith.mulf %169, %145 : vector<8x32xf32>
    %181 = arith.addf %179, %180 : vector<8x32xf32>
    %182 = arith.index_cast %c4_i32 : i32 to index
    %c0_44 = arith.constant 0 : index
    %c0_45 = arith.constant 0 : index
    %183 = vector.load %arg5[%182, %c0_44, %c0_45] : memref<8x8x32xf32, #tpu.memory_space<vmem>>, vector<1x8x32xf32>
    %184 = vector.shape_cast %183 : vector<1x8x32xf32> to vector<8x32xf32>
    %185 = vector.shape_cast %181 : vector<8x32xf32> to vector<1x8x32xf32>
    tpu.vector_store %arg5[%182, %c0_44, %c0_45], %185 {strides = array<i32>} : memref<8x8x32xf32, #tpu.memory_space<vmem>>, vector<1x8x32xf32>,
    %c5_i32 = arith.constant 5 : i32
    %186 = arith.index_cast %c5_i32 : i32 to index
    %c0_46 = arith.constant 0 : index
    %c0_47 = arith.constant 0 : index
    %187 = vector.load %arg2[%186, %c0_46, %c0_47] : memref<8x8x96xf32, #tpu.memory_space<vmem>>, vector<1x8x96xf32>
    %188 = vector.shape_cast %187 : vector<1x8x96xf32> to vector<8x96xf32>
    %cst_48 = arith.constant dense<0.000000e+00> : vector<8x96xf32>
    %189 = tpu.matmul %181, %3, %cst_48 {dimension_numbers = #tpu.dot_dimension_numbers<[1], [0], [0], [1], [0, 0, 1, 1], [], []>} : vector<8x32xf32>, vector<32x96xf32>, vector<8x96xf32> -> vector<8x96xf32>
    %190 = vector.extract_strided_slice %188 {offsets = [0, 0], sizes = [8, 32], strides = [1, 1]} : vector<8x96xf32> to vector<8x32xf32>
    %191 = vector.extract_strided_slice %189 {offsets = [0, 0], sizes = [8, 32], strides = [1, 1]} : vector<8x96xf32> to vector<8x32xf32>
    %192 = arith.addf %190, %191 : vector<8x32xf32>
    %193 = arith.negf %192 : vector<8x32xf32>
    %194 = math.exp %193 : vector<8x32xf32>
    %cst_49 = arith.constant 1.000000e+00 : f32
    %195 = vector.broadcast %cst_49 : f32 to vector<8x32xf32>
    %196 = arith.addf %195, %194 : vector<8x32xf32>
    %197 = arith.divf %195, %196 : vector<8x32xf32>
    %198 = vector.extract_strided_slice %188 {offsets = [0, 32], sizes = [8, 32], strides = [1, 1]} : vector<8x96xf32> to vector<8x32xf32>
    %199 = vector.extract_strided_slice %189 {offsets = [0, 32], sizes = [8, 32], strides = [1, 1]} : vector<8x96xf32> to vector<8x32xf32>
    %200 = arith.addf %198, %199 : vector<8x32xf32>
    %201 = arith.negf %200 : vector<8x32xf32>
    %202 = math.exp %201 : vector<8x32xf32>
    %cst_50 = arith.constant 1.000000e+00 : f32
    %203 = vector.broadcast %cst_50 : f32 to vector<8x32xf32>
    %204 = arith.addf %203, %202 : vector<8x32xf32>
    %205 = arith.divf %203, %204 : vector<8x32xf32>
    %206 = vector.extract_strided_slice %188 {offsets = [0, 64], sizes = [8, 32], strides = [1, 1]} : vector<8x96xf32> to vector<8x32xf32>
    %207 = vector.extract_strided_slice %189 {offsets = [0, 64], sizes = [8, 32], strides = [1, 1]} : vector<8x96xf32> to vector<8x32xf32>
    %208 = vector.broadcast %4 : vector<1x32xf32> to vector<8x32xf32>
    %209 = arith.addf %207, %208 : vector<8x32xf32>
    %210 = arith.mulf %197, %209 : vector<8x32xf32>
    %211 = arith.addf %206, %210 : vector<8x32xf32>
    %212 = math.tanh %211 : vector<8x32xf32>
    %cst_51 = arith.constant 1.000000e+00 : f32
    %213 = vector.broadcast %cst_51 : f32 to vector<8x32xf32>
    %214 = arith.subf %213, %205 : vector<8x32xf32>
    %215 = arith.mulf %214, %212 : vector<8x32xf32>
    %216 = arith.mulf %205, %181 : vector<8x32xf32>
    %217 = arith.addf %215, %216 : vector<8x32xf32>
    %218 = arith.index_cast %c5_i32 : i32 to index
    %c0_52 = arith.constant 0 : index
    %c0_53 = arith.constant 0 : index
    %219 = vector.load %arg5[%218, %c0_52, %c0_53] : memref<8x8x32xf32, #tpu.memory_space<vmem>>, vector<1x8x32xf32>
    %220 = vector.shape_cast %219 : vector<1x8x32xf32> to vector<8x32xf32>
    %221 = vector.shape_cast %217 : vector<8x32xf32> to vector<1x8x32xf32>
    tpu.vector_store %arg5[%218, %c0_52, %c0_53], %221 {strides = array<i32>} : memref<8x8x32xf32, #tpu.memory_space<vmem>>, vector<1x8x32xf32>,
    %c6_i32 = arith.constant 6 : i32
    %222 = arith.index_cast %c6_i32 : i32 to index
    %c0_54 = arith.constant 0 : index
    %c0_55 = arith.constant 0 : index
    %223 = vector.load %arg2[%222, %c0_54, %c0_55] : memref<8x8x96xf32, #tpu.memory_space<vmem>>, vector<1x8x96xf32>
    %224 = vector.shape_cast %223 : vector<1x8x96xf32> to vector<8x96xf32>
    %cst_56 = arith.constant dense<0.000000e+00> : vector<8x96xf32>
    %225 = tpu.matmul %217, %3, %cst_56 {dimension_numbers = #tpu.dot_dimension_numbers<[1], [0], [0], [1], [0, 0, 1, 1], [], []>} : vector<8x32xf32>, vector<32x96xf32>, vector<8x96xf32> -> vector<8x96xf32>
    %226 = vector.extract_strided_slice %224 {offsets = [0, 0], sizes = [8, 32], strides = [1, 1]} : vector<8x96xf32> to vector<8x32xf32>
    %227 = vector.extract_strided_slice %225 {offsets = [0, 0], sizes = [8, 32], strides = [1, 1]} : vector<8x96xf32> to vector<8x32xf32>
    %228 = arith.addf %226, %227 : vector<8x32xf32>
    %229 = arith.negf %228 : vector<8x32xf32>
    %230 = math.exp %229 : vector<8x32xf32>
    %cst_57 = arith.constant 1.000000e+00 : f32
    %231 = vector.broadcast %cst_57 : f32 to vector<8x32xf32>
    %232 = arith.addf %231, %230 : vector<8x32xf32>
    %233 = arith.divf %231, %232 : vector<8x32xf32>
    %234 = vector.extract_strided_slice %224 {offsets = [0, 32], sizes = [8, 32], strides = [1, 1]} : vector<8x96xf32> to vector<8x32xf32>
    %235 = vector.extract_strided_slice %225 {offsets = [0, 32], sizes = [8, 32], strides = [1, 1]} : vector<8x96xf32> to vector<8x32xf32>
    %236 = arith.addf %234, %235 : vector<8x32xf32>
    %237 = arith.negf %236 : vector<8x32xf32>
    %238 = math.exp %237 : vector<8x32xf32>
    %cst_58 = arith.constant 1.000000e+00 : f32
    %239 = vector.broadcast %cst_58 : f32 to vector<8x32xf32>
    %240 = arith.addf %239, %238 : vector<8x32xf32>
    %241 = arith.divf %239, %240 : vector<8x32xf32>
    %242 = vector.extract_strided_slice %224 {offsets = [0, 64], sizes = [8, 32], strides = [1, 1]} : vector<8x96xf32> to vector<8x32xf32>
    %243 = vector.extract_strided_slice %225 {offsets = [0, 64], sizes = [8, 32], strides = [1, 1]} : vector<8x96xf32> to vector<8x32xf32>
    %244 = vector.broadcast %4 : vector<1x32xf32> to vector<8x32xf32>
    %245 = arith.addf %243, %244 : vector<8x32xf32>
    %246 = arith.mulf %233, %245 : vector<8x32xf32>
    %247 = arith.addf %242, %246 : vector<8x32xf32>
    %248 = math.tanh %247 : vector<8x32xf32>
    %cst_59 = arith.constant 1.000000e+00 : f32
    %249 = vector.broadcast %cst_59 : f32 to vector<8x32xf32>
    %250 = arith.subf %249, %241 : vector<8x32xf32>
    %251 = arith.mulf %250, %248 : vector<8x32xf32>
    %252 = arith.mulf %241, %217 : vector<8x32xf32>
    %253 = arith.addf %251, %252 : vector<8x32xf32>
    %254 = arith.index_cast %c6_i32 : i32 to index
    %c0_60 = arith.constant 0 : index
    %c0_61 = arith.constant 0 : index
    %255 = vector.load %arg5[%254, %c0_60, %c0_61] : memref<8x8x32xf32, #tpu.memory_space<vmem>>, vector<1x8x32xf32>
    %256 = vector.shape_cast %255 : vector<1x8x32xf32> to vector<8x32xf32>
    %257 = vector.shape_cast %253 : vector<8x32xf32> to vector<1x8x32xf32>
    tpu.vector_store %arg5[%254, %c0_60, %c0_61], %257 {strides = array<i32>} : memref<8x8x32xf32, #tpu.memory_space<vmem>>, vector<1x8x32xf32>,
    %c7_i32 = arith.constant 7 : i32
    %258 = arith.index_cast %c7_i32 : i32 to index
    %c0_62 = arith.constant 0 : index
    %c0_63 = arith.constant 0 : index
    %259 = vector.load %arg2[%258, %c0_62, %c0_63] : memref<8x8x96xf32, #tpu.memory_space<vmem>>, vector<1x8x96xf32>
    %260 = vector.shape_cast %259 : vector<1x8x96xf32> to vector<8x96xf32>
    %cst_64 = arith.constant dense<0.000000e+00> : vector<8x96xf32>
    %261 = tpu.matmul %253, %3, %cst_64 {dimension_numbers = #tpu.dot_dimension_numbers<[1], [0], [0], [1], [0, 0, 1, 1], [], []>} : vector<8x32xf32>, vector<32x96xf32>, vector<8x96xf32> -> vector<8x96xf32>
    %262 = vector.extract_strided_slice %260 {offsets = [0, 0], sizes = [8, 32], strides = [1, 1]} : vector<8x96xf32> to vector<8x32xf32>
    %263 = vector.extract_strided_slice %261 {offsets = [0, 0], sizes = [8, 32], strides = [1, 1]} : vector<8x96xf32> to vector<8x32xf32>
    %264 = arith.addf %262, %263 : vector<8x32xf32>
    %265 = arith.negf %264 : vector<8x32xf32>
    %266 = math.exp %265 : vector<8x32xf32>
    %cst_65 = arith.constant 1.000000e+00 : f32
    %267 = vector.broadcast %cst_65 : f32 to vector<8x32xf32>
    %268 = arith.addf %267, %266 : vector<8x32xf32>
    %269 = arith.divf %267, %268 : vector<8x32xf32>
    %270 = vector.extract_strided_slice %260 {offsets = [0, 32], sizes = [8, 32], strides = [1, 1]} : vector<8x96xf32> to vector<8x32xf32>
    %271 = vector.extract_strided_slice %261 {offsets = [0, 32], sizes = [8, 32], strides = [1, 1]} : vector<8x96xf32> to vector<8x32xf32>
    %272 = arith.addf %270, %271 : vector<8x32xf32>
    %273 = arith.negf %272 : vector<8x32xf32>
    %274 = math.exp %273 : vector<8x32xf32>
    %cst_66 = arith.constant 1.000000e+00 : f32
    %275 = vector.broadcast %cst_66 : f32 to vector<8x32xf32>
    %276 = arith.addf %275, %274 : vector<8x32xf32>
    %277 = arith.divf %275, %276 : vector<8x32xf32>
    %278 = vector.extract_strided_slice %260 {offsets = [0, 64], sizes = [8, 32], strides = [1, 1]} : vector<8x96xf32> to vector<8x32xf32>
    %279 = vector.extract_strided_slice %261 {offsets = [0, 64], sizes = [8, 32], strides = [1, 1]} : vector<8x96xf32> to vector<8x32xf32>
    %280 = vector.broadcast %4 : vector<1x32xf32> to vector<8x32xf32>
    %281 = arith.addf %279, %280 : vector<8x32xf32>
    %282 = arith.mulf %269, %281 : vector<8x32xf32>
    %283 = arith.addf %278, %282 : vector<8x32xf32>
    %284 = math.tanh %283 : vector<8x32xf32>
    %cst_67 = arith.constant 1.000000e+00 : f32
    %285 = vector.broadcast %cst_67 : f32 to vector<8x32xf32>
    %286 = arith.subf %285, %277 : vector<8x32xf32>
    %287 = arith.mulf %286, %284 : vector<8x32xf32>
    %288 = arith.mulf %277, %253 : vector<8x32xf32>
    %289 = arith.addf %287, %288 : vector<8x32xf32>
    %290 = arith.index_cast %c7_i32 : i32 to index
    %c0_68 = arith.constant 0 : index
    %c0_69 = arith.constant 0 : index
    %291 = vector.load %arg5[%290, %c0_68, %c0_69] : memref<8x8x32xf32, #tpu.memory_space<vmem>>, vector<1x8x32xf32>
    %292 = vector.shape_cast %291 : vector<1x8x32xf32> to vector<8x32xf32>
    %293 = vector.shape_cast %289 : vector<8x32xf32> to vector<1x8x32xf32>
    tpu.vector_store %arg5[%290, %c0_68, %c0_69], %293 {strides = array<i32>} : memref<8x8x32xf32, #tpu.memory_space<vmem>>, vector<1x8x32xf32>,
    %c8_i32 = arith.constant 8 : i32
    %c0_70 = arith.constant 0 : index
    %c0_71 = arith.constant 0 : index
    %294 = vector.load %arg6[%c0_70, %c0_71] : memref<8x32xf32, #tpu.memory_space<vmem>>, vector<8x32xf32>
    tpu.vector_store %arg6[%c0_70, %c0_71], %289 {strides = array<i32>} : memref<8x32xf32, #tpu.memory_space<vmem>>, vector<8x32xf32>,
    return
  }
  func.func @transform_0(%arg0: i32) -> (i32, i32) {
    %c0_i32 = arith.constant 0 : i32
    %c0_i32_0 = arith.constant 0 : i32
    %c0_i32_1 = arith.constant 0 : i32
    return %c0_i32, %c0_i32_0 : i32, i32
  }
  func.func @transform_1(%arg0: i32) -> (i32, i32, i32) {
    %c0_i32 = arith.constant 0 : i32
    %c0_i32_0 = arith.constant 0 : i32
    %c0_i32_1 = arith.constant 0 : i32
    return %arg0, %c0_i32, %c0_i32_0 : i32, i32, i32
  }
  func.func @transform_2(%arg0: i32) -> (i32, i32) {
    %c0_i32 = arith.constant 0 : i32
    %c0_i32_0 = arith.constant 0 : i32
    %c0_i32_1 = arith.constant 0 : i32
    return %c0_i32, %c0_i32_0 : i32, i32
  }
  func.func @transform_3(%arg0: i32) -> (i32, i32) {
    %c0_i32 = arith.constant 0 : i32
    %c0_i32_0 = arith.constant 0 : i32
    %c0_i32_1 = arith.constant 0 : i32
    return %c0_i32, %c0_i32_0 : i32, i32
  }
  func.func @transform_4(%arg0: i32) -> (i32, i32, i32) {
    %c0_i32 = arith.constant 0 : i32
    %c0_i32_0 = arith.constant 0 : i32
    %c0_i32_1 = arith.constant 0 : i32
    return %arg0, %c0_i32, %c0_i32_0 : i32, i32, i32
  }
}

</mosaic_0001>

<llo_original>
// kernel: tpu_custom_call.1
$region0: #{tpu_custom_call.1}
  #allocation0 [shape = 'u32[]', space=smem, size = 0x4, offset = 0x4, fixed_abs, tag = 'smem constant byte address 0x4 - core index']
  #allocation1 [shape = 'u32[144,128]{1,0:T(1,128)}', space=vmem, size = 0x12000, scoped, tag = 'internal scratch']
  #allocation2 [shape = 'f32[8,32]{1,0:T(8,128)}', space=vmem, size = 0x1000, scoped, tag = 'scratch operand']
  %s0 = inlined_call_operand.hbm [shape: f32[8,32], index: 0, kind: input, shape index: {}]
  %s1 = inlined_call_operand.hbm [shape: f32[8,8,96], index: 1, kind: input, shape index: {}]
  %s2 = inlined_call_operand.hbm [shape: f32[32,96], index: 2, kind: input, shape index: {}]
  %s3 = inlined_call_operand.vmem [shape: f32[1,32], index: 3, kind: input, shape index: {}]
  %s4 = inlined_call_operand.hbm [shape: f32[8,8,32], index: 4, kind: output, shape index: {}]
  %s5 = sld [smem:[#allocation0]]
  $region42: #{tpu_custom_call.1} parent=0
    _
  %s7 = ssub.s32 1, %s5
  %s8 = scalar_select 0, %s7, %s5
  $region1: #{tpu_custom_call.1} parent=0
    #allocation3 [shape = 'u8[4096]{0}', space=vmem, size = 0x1000, scoped, tag = 'input window, operand 0, single buffered']
    #allocation4 [shape = 's32[1]{0}', space=sflag, size = 0x4, scoped, tag = 'scoped memory for tpu_custom_call.1']
    #allocation5 [shape = 's32[1]{0}', space=sflag, size = 0x4, scoped, tag = 'scoped memory for tpu_custom_call.1']
    #allocation6 [shape = 'u8[32768]{0}', space=vmem, size = 0x8000, scoped, tag = 'input window, operand 1, single buffered']
    #allocation7 [shape = 's32[1]{0}', space=sflag, size = 0x4, scoped, tag = 'scoped memory for tpu_custom_call.1']
    #allocation8 [shape = 'u8[16384]{0}', space=vmem, size = 0x4000, scoped, tag = 'input window, operand 2, single buffered']
    #allocation9 [shape = 'u8[32768]{0}', space=vmem, size = 0x8000, scoped, tag = 'output window, operand 0, single buffered']
    %9 = vsyncpa [#allocation4], 0
    %10 = vsyncpa [#allocation7], 0
    %11 = vsyncpa [#allocation5], 0
    // Predicated region
    $region2: #{tpu_custom_call.1} parent=1 // pred_check
      _
    $region3: #{tpu_custom_call.1} parent=1 // pred_check_branch
      %13 = sbr.rel (0) target = $region5
    $region4: #{tpu_custom_call.1} parent=1 // pred_region
      %s15 = ssub.s32 128, 128
      %16 = vsyncadd [#allocation4], %s15
      %s18 = sshll.u32 [#allocation3], 4
      %s19 = int_to_ptr.vmem [resolvable:$true] %s18
      %21 = dma.hbm_to_vmem [thread:$0]  %s0, 128, %s19, [#allocation4]
    $region5: #{tpu_custom_call.1} parent=1 // pred_fallthru
      _
    // Predicated region
    $region6: #{tpu_custom_call.1} parent=1 // pred_check
      _
    $region7: #{tpu_custom_call.1} parent=1 // pred_check_branch
      %23 = sbr.rel (0) target = $region9
    $region8: #{tpu_custom_call.1} parent=1 // pred_region
      %s25 = ssub.s32 1024, 1024
      %26 = vsyncadd [#allocation7], %s25
      %s27 = sshll.u32 [#allocation6], 4
      %s28 = int_to_ptr.vmem [resolvable:$true] %s27
      %33 = dma.hbm_to_vmem [thread:$0]  %s1, 1024, %s28, [#allocation7], 128, 128, 8
    $region9: #{tpu_custom_call.1} parent=1 // pred_fallthru
      _
    // Predicated region
    $region10: #{tpu_custom_call.1} parent=1 // pred_check
      _
    $region11: #{tpu_custom_call.1} parent=1 // pred_check_branch
      %35 = sbr.rel (0) target = $region13
    $region12: #{tpu_custom_call.1} parent=1 // pred_region
      %s37 = ssub.s32 512, 512
      %38 = vsyncadd [#allocation7], %s37
      %s39 = sshll.u32 [#allocation8], 4
      %s40 = int_to_ptr.vmem [resolvable:$true] %s39
      %45 = dma.hbm_to_vmem [thread:$0]  %s2, 512, %s40, [#allocation7], 128, 128, 8
    $region13: #{tpu_custom_call.1} parent=1 // pred_fallthru
      _
    // Predicated region
    $region14: #{tpu_custom_call.1} parent=1 // pred_check
      _
    $region15: #{tpu_custom_call.1} parent=1 // pred_check_branch
      %47 = sbr.rel (0) target = $region17
    $region16: #{tpu_custom_call.1} parent=1 // pred_region
      _
    $region17: #{tpu_custom_call.1} parent=1 // pred_fallthru
      _
    // Predicated region
    $region18: #{tpu_custom_call.1} parent=1 // pred_check
      _
    $region19: #{tpu_custom_call.1} parent=1 // pred_check_branch
      %49 = sbr.rel (0) target = $region21
    $region20: #{tpu_custom_call.1} parent=1 // pred_region
      %50 = dma.done [#allocation4], 128
    $region21: #{tpu_custom_call.1} parent=1 // pred_fallthru
      _
    // Predicated region
    $region22: #{tpu_custom_call.1} parent=1 // pred_check
      _
    $region23: #{tpu_custom_call.1} parent=1 // pred_check_branch
      %52 = sbr.rel (0) target = $region25
    $region24: #{tpu_custom_call.1} parent=1 // pred_region
      %53 = dma.done [#allocation7], 1024
    $region25: #{tpu_custom_call.1} parent=1 // pred_fallthru
      _
    // Predicated region
    $region26: #{tpu_custom_call.1} parent=1 // pred_check
      _
    $region27: #{tpu_custom_call.1} parent=1 // pred_check_branch
      %55 = sbr.rel (0) target = $region29
    $region28: #{tpu_custom_call.1} parent=1 // pred_region
      %56 = dma.done [#allocation7], 512
    $region29: #{tpu_custom_call.1} parent=1 // pred_fallthru
      _
    %p57 = scmp.eq.s32.totalorder 0, 0
    // Predicated region
    $region30: #{tpu_custom_call.1} parent=1 // pred_check
      %p58 = pneg %p57
    $region31: #{tpu_custom_call.1} parent=1 // pred_check_branch
      %60 = sbr.rel (%p58) target = $region33
    $region32: #{tpu_custom_call.1} parent=1 // pred_region
      %v61 = vld [vmem:[#allocation3] sm:$0xff]
      %vm62 = vcmask 261120
      %63 = vst.msk [vmem:[#allocation2] sm:$0xff] %vm62, %v61
    $region33: #{tpu_custom_call.1} parent=1 // pred_fallthru
      _
    %v64 = vld [vmem:[#allocation8] sm:$0xff]
    %v65 = vld [vmem:[#allocation8 + $0x8] sm:$0xff]
    %v66 = vld [vmem:[#allocation8 + $0x10] sm:$0xff]
    %v67 = vld [vmem:[#allocation8 + $0x18] sm:$0xff]
    %v68 = vld [vmem:[%s3] sm:$0x1]
    %v69 = vld [vmem:[#allocation2] sm:$0xff]
    %v70 = vld [vmem:[#allocation6] sm:$0xff]
    %vm71 = vcmask 261120
    %v73 = vsel %vm71, %v69, 0
    %75 = vmatprep.subr.mxu0 0.0
    %76 = vmatpush1.msra.mxu0 %v64
    %77 = vmatprep.subr.mxu0 0.0
    %78 = vmatpush1.msra.mxu0 %v65
    %79 = vmatprep.subr.mxu0 0.0
    %80 = vmatpush1.msra.mxu0 %v66
    %81 = vmatprep.subr.mxu0 0.0
    %82 = vmatpush1.msra.mxu0 %v67
    %83 = vmatprep.subr.mxu0 0.0
    %84 = vmatpush1.msra.mxu0 0.0
    %85 = vmatprep.subr.mxu0 0.0
    %86 = vmatpush1.msra.mxu0 0.0
    %87 = vmatprep.subr.mxu0 0.0
    %88 = vmatpush1.msra.mxu0 0.0
    %89 = vmatprep.subr.mxu0 0.0
    %90 = vmatpush1.msra.mxu0 0.0
    %91 = vmatprep.subr.mxu0 0.0
    %92 = vmatpush1.msra.mxu0 0.0
    %93 = vmatprep.subr.mxu0 0.0
    %94 = vmatpush1.msra.mxu0 0.0
    %95 = vmatprep.subr.mxu0 0.0
    %96 = vmatpush1.msra.mxu0 0.0
    %97 = vmatprep.subr.mxu0 0.0
    %98 = vmatpush1.msra.mxu0 0.0
    %99 = vmatprep.subr.mxu0 0.0
    %100 = vmatpush1.msra.mxu0 0.0
    %101 = vmatprep.subr.mxu0 0.0
    %102 = vmatpush1.msra.mxu0 0.0
    %103 = vmatprep.subr.mxu0 0.0
    %104 = vmatpush1.msra.mxu0 0.0
    %105 = vmatprep.subr.mxu0 0.0
    %106 = vmatpush1.msra.mxu0 0.0
    %107 = vmatprep.subr.mxu0 0.0
    %108 = vmatpush1.msra.mxu0 0.0
    %109 = vmatprep.subr.mxu0 0.0
    %110 = vmatpush1.msra.mxu0 0.0
    %111 = vmatprep.subr.mxu0 0.0
    %112 = vmatpush1.msra.mxu0 0.0
    %113 = vmatprep.subr.mxu0 0.0
    %114 = vmatpush1.msra.mxu0 0.0
    %115 = vmatprep.subr.mxu0 0.0
    %116 = vmatpush1.msra.mxu0 0.0
    %117 = vmatprep.subr.mxu0 0.0
    %118 = vmatpush1.msra.mxu0 0.0
    %119 = vmatprep.subr.mxu0 0.0
    %120 = vmatpush1.msra.mxu0 0.0
    %121 = vmatprep.subr.mxu0 0.0
    %122 = vmatpush1.msra.mxu0 0.0
    %123 = vmatprep.subr.mxu0 0.0
    %124 = vmatpush1.msra.mxu0 0.0
    %125 = vmatprep.subr.mxu0 0.0
    %126 = vmatpush1.msra.mxu0 0.0
    %127 = vmatprep.subr.mxu0 0.0
    %128 = vmatpush1.msra.mxu0 0.0
    %129 = vmatprep.subr.mxu0 0.0
    %130 = vmatpush1.msra.mxu0 0.0
    %131 = vmatprep.subr.mxu0 0.0
    %132 = vmatpush1.msra.mxu0 0.0
    %133 = vmatprep.subr.mxu0 0.0
    %134 = vmatpush1.msra.mxu0 0.0
    %135 = vmatprep.subr.mxu0 0.0
    %136 = vmatpush1.msra.mxu0 0.0
    %137 = vmatprep.subr.mxu0 0.0
    %138 = vmatpush1.msra.mxu0 0.0
    %139 = vmatprep.mubr.f32.mxu0 0.0
    %140 = vmatmul.mubr.f32.gmra.mrb[0].mxu0 %v73
    %v141 = vpop.f32.mrb[0].mxu0
    %v142 = vadd.f32 0.0, %v141
    %v143 = vpop.f32.mrb[0].mxu0
    %144 = vdwg.mxu0
    %v145 = vadd.f32 %v70, %v142
    %v146 = vxor.u32 %v145, 2147483648
    %v147 = vmul.f32 %v146, 1.442695
    %v148 = vpow.pop %v147
    %v149 = vadd.f32 %v148, 1.0
    %v150 = vrcp.pop %v149
    %v151 = vmul.f32 1.0, %v150
    %v153 = vlaneseq
    %v154 = vshrl.u32 %v153, 7
    %v155 = vsub.s32 0, %v154
    %v156 = vrot.slane %v68, %v155
    %157 = vrot.lane.b32.xlu0 %v156, 64
    %v158 = vpop.permute.xlu0 %157
    %v160 = vadd.f32 %v142, %v158
    %162 = vrot.lane.b32.xlu0 %v160, 64
    %v163 = vpop.permute.xlu0 %162
    %v165 = vmul.f32 %v151, %v163
    %167 = vrot.lane.b32.xlu0 %v165, 64
    %v168 = vpop.permute.xlu0 %167
    %v170 = vadd.f32 %v70, %v168
    %v171 = vtanh.pop %v170
    %v172 = vsub.f32 1.0, %v151
    %174 = vrot.lane.b32.xlu0 %v171, 96
    %v175 = vpop.permute.xlu0 %174
    %v177 = vmul.f32 %v172, %v175
    %178 = vrot.lane.b32.xlu0 %v69, 32
    %v179 = vpop.permute.xlu0 %178
    %v181 = vmul.f32 %v151, %v179
    %v182 = vadd.f32 %v177, %v181
    %184 = vrot.lane.b32.xlu0 %v182, 96
    %v185 = vpop.permute.xlu0 %184
    %187 = vst.msk [vmem:[#allocation9] sm:$0xff] %vm71, %v185
    %s188 = scalar_lea.vmem [#allocation6], 8
    %v189 = vld [vmem:[%s188] sm:$0xff]
    %v190 = vsel %vm71, %v185, 0
    %192 = vmatprep.subr.mxu0 0.0
    %193 = vmatpush1.msra.mxu0 %v64
    %194 = vmatprep.subr.mxu0 0.0
    %195 = vmatpush1.msra.mxu0 %v65
    %196 = vmatprep.subr.mxu0 0.0
    %197 = vmatpush1.msra.mxu0 %v66
    %198 = vmatprep.subr.mxu0 0.0
    %199 = vmatpush1.msra.mxu0 %v67
    %200 = vmatprep.subr.mxu0 0.0
    %201 = vmatpush1.msra.mxu0 0.0
    %202 = vmatprep.subr.mxu0 0.0
    %203 = vmatpush1.msra.mxu0 0.0
    %204 = vmatprep.subr.mxu0 0.0
    %205 = vmatpush1.msra.mxu0 0.0
    %206 = vmatprep.subr.mxu0 0.0
    %207 = vmatpush1.msra.mxu0 0.0
    %208 = vmatprep.subr.mxu0 0.0
    %209 = vmatpush1.msra.mxu0 0.0
    %210 = vmatprep.subr.mxu0 0.0
    %211 = vmatpush1.msra.mxu0 0.0
    %212 = vmatprep.subr.mxu0 0.0
    %213 = vmatpush1.msra.mxu0 0.0
    %214 = vmatprep.subr.mxu0 0.0
    %215 = vmatpush1.msra.mxu0 0.0
    %216 = vmatprep.subr.mxu0 0.0
    %217 = vmatpush1.msra.mxu0 0.0
    %218 = vmatprep.subr.mxu0 0.0
    %219 = vmatpush1.msra.mxu0 0.0
    %220 = vmatprep.subr.mxu0 0.0
    %221 = vmatpush1.msra.mxu0 0.0
    %222 = vmatprep.subr.mxu0 0.0
    %223 = vmatpush1.msra.mxu0 0.0
    %224 = vmatprep.subr.mxu0 0.0
    %225 = vmatpush1.msra.mxu0 0.0
    %226 = vmatprep.subr.mxu0 0.0
    %227 = vmatpush1.msra.mxu0 0.0
    %228 = vmatprep.subr.mxu0 0.0
    %229 = vmatpush1.msra.mxu0 0.0
    %230 = vmatprep.subr.mxu0 0.0
    %231 = vmatpush1.msra.mxu0 0.0
    %232 = vmatprep.subr.mxu0 0.0
    %233 = vmatpush1.msra.mxu0 0.0
    %234 = vmatprep.subr.mxu0 0.0
    %235 = vmatpush1.msra.mxu0 0.0
    %236 = vmatprep.subr.mxu0 0.0
    %237 = vmatpush1.msra.mxu0 0.0
    %238 = vmatprep.subr.mxu0 0.0
    %239 = vmatpush1.msra.mxu0 0.0
    %240 = vmatprep.subr.mxu0 0.0
    %241 = vmatpush1.msra.mxu0 0.0
    %242 = vmatprep.subr.mxu0 0.0
    %243 = vmatpush1.msra.mxu0 0.0
    %244 = vmatprep.subr.mxu0 0.0
    %245 = vmatpush1.msra.mxu0 0.0
    %246 = vmatprep.subr.mxu0 0.0
    %247 = vmatpush1.msra.mxu0 0.0
    %248 = vmatprep.subr.mxu0 0.0
    %249 = vmatpush1.msra.mxu0 0.0
    %250 = vmatprep.subr.mxu0 0.0
    %251 = vmatpush1.msra.mxu0 0.0
    %252 = vmatprep.subr.mxu0 0.0
    %253 = vmatpush1.msra.mxu0 0.0
    %254 = vmatprep.subr.mxu0 0.0
    %255 = vmatpush1.msra.mxu0 0.0
    %256 = vmatprep.mubr.f32.mxu0 0.0
    %257 = vmatmul.mubr.f32.gmra.mrb[0].mxu0 %v190
    %v258 = vpop.f32.mrb[0].mxu0
    %v259 = vadd.f32 0.0, %v258
    %v260 = vpop.f32.mrb[0].mxu0
    %261 = vdwg.mxu0
    %v262 = vadd.f32 %v189, %v259
    %v263 = vxor.u32 %v262, 2147483648
    %v264 = vmul.f32 %v263, 1.442695
    %v265 = vpow.pop %v264
    %v266 = vadd.f32 %v265, 1.0
    %v267 = vrcp.pop %v266
    %v268 = vmul.f32 1.0, %v267
    %v269 = vadd.f32 %v259, %v158
    %271 = vrot.lane.b32.xlu0 %v269, 64
    %v272 = vpop.permute.xlu0 %271
    %v274 = vmul.f32 %v268, %v272
    %276 = vrot.lane.b32.xlu0 %v274, 64
    %v277 = vpop.permute.xlu0 %276
    %v279 = vadd.f32 %v189, %v277
    %v280 = vtanh.pop %v279
    %v281 = vsub.f32 1.0, %v268
    %283 = vrot.lane.b32.xlu0 %v280, 96
    %v284 = vpop.permute.xlu0 %283
    %v286 = vmul.f32 %v281, %v284
    %v287 = vmul.f32 %v268, %v182
    %v288 = vadd.f32 %v286, %v287
    %290 = vrot.lane.b32.xlu0 %v288, 96
    %v291 = vpop.permute.xlu0 %290
    %s293 = scalar_lea.vmem [#allocation9], 8
    %294 = vst.msk [vmem:[%s293] sm:$0xff] %vm71, %v291
    %s295 = scalar_lea.vmem [#allocation6], 16
    %v296 = vld [vmem:[%s295] sm:$0xff]
    %v297 = vsel %vm71, %v291, 0
    %299 = vmatprep.subr.mxu0 0.0
    %300 = vmatpush1.msra.mxu0 %v64
    %301 = vmatprep.subr.mxu0 0.0
    %302 = vmatpush1.msra.mxu0 %v65
    %303 = vmatprep.subr.mxu0 0.0
    %304 = vmatpush1.msra.mxu0 %v66
    %305 = vmatprep.subr.mxu0 0.0
    %306 = vmatpush1.msra.mxu0 %v67
    %307 = vmatprep.subr.mxu0 0.0
    %308 = vmatpush1.msra.mxu0 0.0
    %309 = vmatprep.subr.mxu0 0.0
    %310 = vmatpush1.msra.mxu0 0.0
    %311 = vmatprep.subr.mxu0 0.0
    %312 = vmatpush1.msra.mxu0 0.0
    %313 = vmatprep.subr.mxu0 0.0
    %314 = vmatpush1.msra.mxu0 0.0
    %315 = vmatprep.subr.mxu0 0.0
    %316 = vmatpush1.msra.mxu0 0.0
    %317 = vmatprep.subr.mxu0 0.0
    %318 = vmatpush1.msra.mxu0 0.0
    %319 = vmatprep.subr.mxu0 0.0
    %320 = vmatpush1.msra.mxu0 0.0
    %321 = vmatprep.subr.mxu0 0.0
    %322 = vmatpush1.msra.mxu0 0.0
    %323 = vmatprep.subr.mxu0 0.0
    %324 = vmatpush1.msra.mxu0 0.0
    %325 = vmatprep.subr.mxu0 0.0
    %326 = vmatpush1.msra.mxu0 0.0
    %327 = vmatprep.subr.mxu0 0.0
    %328 = vmatpush1.msra.mxu0 0.0
    %329 = vmatprep.subr.mxu0 0.0
    %330 = vmatpush1.msra.mxu0 0.0
    %331 = vmatprep.subr.mxu0 0.0
    %332 = vmatpush1.msra.mxu0 0.0
    %333 = vmatprep.subr.mxu0 0.0
    %334 = vmatpush1.msra.mxu0 0.0
    %335 = vmatprep.subr.mxu0 0.0
    %336 = vmatpush1.msra.mxu0 0.0
    %337 = vmatprep.subr.mxu0 0.0
    %338 = vmatpush1.msra.mxu0 0.0
    %339 = vmatprep.subr.mxu0 0.0
    %340 = vmatpush1.msra.mxu0 0.0
    %341 = vmatprep.subr.mxu0 0.0
    %342 = vmatpush1.msra.mxu0 0.0
    %343 = vmatprep.subr.mxu0 0.0
    %344 = vmatpush1.msra.mxu0 0.0
    %345 = vmatprep.subr.mxu0 0.0
    %346 = vmatpush1.msra.mxu0 0.0
    %347 = vmatprep.subr.mxu0 0.0
    %348 = vmatpush1.msra.mxu0 0.0
    %349 = vmatprep.subr.mxu0 0.0
    %350 = vmatpush1.msra.mxu0 0.0
    %351 = vmatprep.subr.mxu0 0.0
    %352 = vmatpush1.msra.mxu0 0.0
    %353 = vmatprep.subr.mxu0 0.0
    %354 = vmatpush1.msra.mxu0 0.0
    %355 = vmatprep.subr.mxu0 0.0
    %356 = vmatpush1.msra.mxu0 0.0
    %357 = vmatprep.subr.mxu0 0.0
    %358 = vmatpush1.msra.mxu0 0.0
    %359 = vmatprep.subr.mxu0 0.0
    %360 = vmatpush1.msra.mxu0 0.0
    %361 = vmatprep.subr.mxu0 0.0
    %362 = vmatpush1.msra.mxu0 0.0
    %363 = vmatprep.mubr.f32.mxu0 0.0
    %364 = vmatmul.mubr.f32.gmra.mrb[0].mxu0 %v297
    %v365 = vpop.f32.mrb[0].mxu0
    %v366 = vadd.f32 0.0, %v365
    %v367 = vpop.f32.mrb[0].mxu0
    %368 = vdwg.mxu0
    %v369 = vadd.f32 %v296, %v366
    %v370 = vxor.u32 %v369, 2147483648
    %v371 = vmul.f32 %v370, 1.442695
    %v372 = vpow.pop %v371
    %v373 = vadd.f32 %v372, 1.0
    %v374 = vrcp.pop %v373
    %v375 = vmul.f32 1.0, %v374
    %v376 = vadd.f32 %v366, %v158
    %378 = vrot.lane.b32.xlu0 %v376, 64
    %v379 = vpop.permute.xlu0 %378
    %v381 = vmul.f32 %v375, %v379
    %383 = vrot.lane.b32.xlu0 %v381, 64
    %v384 = vpop.permute.xlu0 %383
    %v386 = vadd.f32 %v296, %v384
    %v387 = vtanh.pop %v386
    %v388 = vsub.f32 1.0, %v375
    %390 = vrot.lane.b32.xlu0 %v387, 96
    %v391 = vpop.permute.xlu0 %390
    %v393 = vmul.f32 %v388, %v391
    %v394 = vmul.f32 %v375, %v288
    %v395 = vadd.f32 %v393, %v394
    %397 = vrot.lane.b32.xlu0 %v395, 96
    %v398 = vpop.permute.xlu0 %397
    %s400 = scalar_lea.vmem [#allocation9], 16
    %401 = vst.msk [vmem:[%s400] sm:$0xff] %vm71, %v398
    %s402 = scalar_lea.vmem [#allocation6], 24
    %v403 = vld [vmem:[%s402] sm:$0xff]
    %v404 = vsel %vm71, %v398, 0
    %406 = vmatprep.subr.mxu0 0.0
    %407 = vmatpush1.msra.mxu0 %v64
    %408 = vmatprep.subr.mxu0 0.0
    %409 = vmatpush1.msra.mxu0 %v65
    %410 = vmatprep.subr.mxu0 0.0
    %411 = vmatpush1.msra.mxu0 %v66
    %412 = vmatprep.subr.mxu0 0.0
    %413 = vmatpush1.msra.mxu0 %v67
    %414 = vmatprep.subr.mxu0 0.0
    %415 = vmatpush1.msra.mxu0 0.0
    %416 = vmatprep.subr.mxu0 0.0
    %417 = vmatpush1.msra.mxu0 0.0
    %418 = vmatprep.subr.mxu0 0.0
    %419 = vmatpush1.msra.mxu0 0.0
    %420 = vmatprep.subr.mxu0 0.0
    %421 = vmatpush1.msra.mxu0 0.0
    %422 = vmatprep.subr.mxu0 0.0
    %423 = vmatpush1.msra.mxu0 0.0
    %424 = vmatprep.subr.mxu0 0.0
    %425 = vmatpush1.msra.mxu0 0.0
    %426 = vmatprep.subr.mxu0 0.0
    %427 = vmatpush1.msra.mxu0 0.0
    %428 = vmatprep.subr.mxu0 0.0
    %429 = vmatpush1.msra.mxu0 0.0
    %430 = vmatprep.subr.mxu0 0.0
    %431 = vmatpush1.msra.mxu0 0.0
    %432 = vmatprep.subr.mxu0 0.0
    %433 = vmatpush1.msra.mxu0 0.0
    %434 = vmatprep.subr.mxu0 0.0
    %435 = vmatpush1.msra.mxu0 0.0
    %436 = vmatprep.subr.mxu0 0.0
    %437 = vmatpush1.msra.mxu0 0.0
    %438 = vmatprep.subr.mxu0 0.0
    %439 = vmatpush1.msra.mxu0 0.0
    %440 = vmatprep.subr.mxu0 0.0
    %441 = vmatpush1.msra.mxu0 0.0
    %442 = vmatprep.subr.mxu0 0.0
    %443 = vmatpush1.msra.mxu0 0.0
    %444 = vmatprep.subr.mxu0 0.0
    %445 = vmatpush1.msra.mxu0 0.0
    %446 = vmatprep.subr.mxu0 0.0
    %447 = vmatpush1.msra.mxu0 0.0
    %448 = vmatprep.subr.mxu0 0.0
    %449 = vmatpush1.msra.mxu0 0.0
    %450 = vmatprep.subr.mxu0 0.0
    %451 = vmatpush1.msra.mxu0 0.0
    %452 = vmatprep.subr.mxu0 0.0
    %453 = vmatpush1.msra.mxu0 0.0
    %454 = vmatprep.subr.mxu0 0.0
    %455 = vmatpush1.msra.mxu0 0.0
    %456 = vmatprep.subr.mxu0 0.0
    %457 = vmatpush1.msra.mxu0 0.0
    %458 = vmatprep.subr.mxu0 0.0
    %459 = vmatpush1.msra.mxu0 0.0
    %460 = vmatprep.subr.mxu0 0.0
    %461 = vmatpush1.msra.mxu0 0.0
    %462 = vmatprep.subr.mxu0 0.0
    %463 = vmatpush1.msra.mxu0 0.0
    %464 = vmatprep.subr.mxu0 0.0
    %465 = vmatpush1.msra.mxu0 0.0
    %466 = vmatprep.subr.mxu0 0.0
    %467 = vmatpush1.msra.mxu0 0.0
    %468 = vmatprep.subr.mxu0 0.0
    %469 = vmatpush1.msra.mxu0 0.0
    %470 = vmatprep.mubr.f32.mxu0 0.0
    %471 = vmatmul.mubr.f32.gmra.mrb[0].mxu0 %v404
    %v472 = vpop.f32.mrb[0].mxu0
    %v473 = vadd.f32 0.0, %v472
    %v474 = vpop.f32.mrb[0].mxu0
    %475 = vdwg.mxu0
    %v476 = vadd.f32 %v403, %v473
    %v477 = vxor.u32 %v476, 2147483648
    %v478 = vmul.f32 %v477, 1.442695
    %v479 = vpow.pop %v478
    %v480 = vadd.f32 %v479, 1.0
    %v481 = vrcp.pop %v480
    %v482 = vmul.f32 1.0, %v481
    %v483 = vadd.f32 %v473, %v158
    %485 = vrot.lane.b32.xlu0 %v483, 64
    %v486 = vpop.permute.xlu0 %485
    %v488 = vmul.f32 %v482, %v486
    %490 = vrot.lane.b32.xlu0 %v488, 64
    %v491 = vpop.permute.xlu0 %490
    %v493 = vadd.f32 %v403, %v491
    %v494 = vtanh.pop %v493
    %v495 = vsub.f32 1.0, %v482
    %497 = vrot.lane.b32.xlu0 %v494, 96
    %v498 = vpop.permute.xlu0 %497
    %v500 = vmul.f32 %v495, %v498
    %v501 = vmul.f32 %v482, %v395
    %v502 = vadd.f32 %v500, %v501
    %504 = vrot.lane.b32.xlu0 %v502, 96
    %v505 = vpop.permute.xlu0 %504
    %s507 = scalar_lea.vmem [#allocation9], 24
    %508 = vst.msk [vmem:[%s507] sm:$0xff] %vm71, %v505
    %s509 = scalar_lea.vmem [#allocation6], 32
    %v510 = vld [vmem:[%s509] sm:$0xff]
    %v511 = vsel %vm71, %v505, 0
    %513 = vmatprep.subr.mxu0 0.0
    %514 = vmatpush1.msra.mxu0 %v64
    %515 = vmatprep.subr.mxu0 0.0
    %516 = vmatpush1.msra.mxu0 %v65
    %517 = vmatprep.subr.mxu0 0.0
    %518 = vmatpush1.msra.mxu0 %v66
    %519 = vmatprep.subr.mxu0 0.0
    %520 = vmatpush1.msra.mxu0 %v67
    %521 = vmatprep.subr.mxu0 0.0
    %522 = vmatpush1.msra.mxu0 0.0
    %523 = vmatprep.subr.mxu0 0.0
    %524 = vmatpush1.msra.mxu0 0.0
    %525 = vmatprep.subr.mxu0 0.0
    %526 = vmatpush1.msra.mxu0 0.0
    %527 = vmatprep.subr.mxu0 0.0
    %528 = vmatpush1.msra.mxu0 0.0
    %529 = vmatprep.subr.mxu0 0.0
    %530 = vmatpush1.msra.mxu0 0.0
    %531 = vmatprep.subr.mxu0 0.0
    %532 = vmatpush1.msra.mxu0 0.0
    %533 = vmatprep.subr.mxu0 0.0
    %534 = vmatpush1.msra.mxu0 0.0
    %535 = vmatprep.subr.mxu0 0.0
    %536 = vmatpush1.msra.mxu0 0.0
    %537 = vmatprep.subr.mxu0 0.0
    %538 = vmatpush1.msra.mxu0 0.0
    %539 = vmatprep.subr.mxu0 0.0
    %540 = vmatpush1.msra.mxu0 0.0
    %541 = vmatprep.subr.mxu0 0.0
    %542 = vmatpush1.msra.mxu0 0.0
    %543 = vmatprep.subr.mxu0 0.0
    %544 = vmatpush1.msra.mxu0 0.0
    %545 = vmatprep.subr.mxu0 0.0
    %546 = vmatpush1.msra.mxu0 0.0
    %547 = vmatprep.subr.mxu0 0.0
    %548 = vmatpush1.msra.mxu0 0.0
    %549 = vmatprep.subr.mxu0 0.0
    %550 = vmatpush1.msra.mxu0 0.0
    %551 = vmatprep.subr.mxu0 0.0
    %552 = vmatpush1.msra.mxu0 0.0
    %553 = vmatprep.subr.mxu0 0.0
    %554 = vmatpush1.msra.mxu0 0.0
    %555 = vmatprep.subr.mxu0 0.0
    %556 = vmatpush1.msra.mxu0 0.0
    %557 = vmatprep.subr.mxu0 0.0
    %558 = vmatpush1.msra.mxu0 0.0
    %559 = vmatprep.subr.mxu0 0.0
    %560 = vmatpush1.msra.mxu0 0.0
    %561 = vmatprep.subr.mxu0 0.0
    %562 = vmatpush1.msra.mxu0 0.0
    %563 = vmatprep.subr.mxu0 0.0
    %564 = vmatpush1.msra.mxu0 0.0
    %565 = vmatprep.subr.mxu0 0.0
    %566 = vmatpush1.msra.mxu0 0.0
    %567 = vmatprep.subr.mxu0 0.0
    %568 = vmatpush1.msra.mxu0 0.0
    %569 = vmatprep.subr.mxu0 0.0
    %570 = vmatpush1.msra.mxu0 0.0
    %571 = vmatprep.subr.mxu0 0.0
    %572 = vmatpush1.msra.mxu0 0.0
    %573 = vmatprep.subr.mxu0 0.0
    %574 = vmatpush1.msra.mxu0 0.0
    %575 = vmatprep.subr.mxu0 0.0
    %576 = vmatpush1.msra.mxu0 0.0
    %577 = vmatprep.mubr.f32.mxu0 0.0
    %578 = vmatmul.mubr.f32.gmra.mrb[0].mxu0 %v511
    %v579 = vpop.f32.mrb[0].mxu0
    %v580 = vadd.f32 0.0, %v579
    %v581 = vpop.f32.mrb[0].mxu0
    %582 = vdwg.mxu0
    %v583 = vadd.f32 %v510, %v580
    %v584 = vxor.u32 %v583, 2147483648
    %v585 = vmul.f32 %v584, 1.442695
    %v586 = vpow.pop %v585
    %v587 = vadd.f32 %v586, 1.0
    %v588 = vrcp.pop %v587
    %v589 = vmul.f32 1.0, %v588
    %v590 = vadd.f32 %v580, %v158
    %592 = vrot.lane.b32.xlu0 %v590, 64
    %v593 = vpop.permute.xlu0 %592
    %v595 = vmul.f32 %v589, %v593
    %597 = vrot.lane.b32.xlu0 %v595, 64
    %v598 = vpop.permute.xlu0 %597
    %v600 = vadd.f32 %v510, %v598
    %v601 = vtanh.pop %v600
    %v602 = vsub.f32 1.0, %v589
    %604 = vrot.lane.b32.xlu0 %v601, 96
    %v605 = vpop.permute.xlu0 %604
    %v607 = vmul.f32 %v602, %v605
    %v608 = vmul.f32 %v589, %v502
    %v609 = vadd.f32 %v607, %v608
    %611 = vrot.lane.b32.xlu0 %v609, 96
    %v612 = vpop.permute.xlu0 %611
    %s614 = scalar_lea.vmem [#allocation9], 32
    %615 = vst.msk [vmem:[%s614] sm:$0xff] %vm71, %v612
    %s616 = scalar_lea.vmem [#allocation6], 40
    %v617 = vld [vmem:[%s616] sm:$0xff]
    %v618 = vsel %vm71, %v612, 0
    %620 = vmatprep.subr.mxu0 0.0
    %621 = vmatpush1.msra.mxu0 %v64
    %622 = vmatprep.subr.mxu0 0.0
    %623 = vmatpush1.msra.mxu0 %v65
    %624 = vmatprep.subr.mxu0 0.0
    %625 = vmatpush1.msra.mxu0 %v66
    %626 = vmatprep.subr.mxu0 0.0
    %627 = vmatpush1.msra.mxu0 %v67
    %628 = vmatprep.subr.mxu0 0.0
    %629 = vmatpush1.msra.mxu0 0.0
    %630 = vmatprep.subr.mxu0 0.0
    %631 = vmatpush1.msra.mxu0 0.0
    %632 = vmatprep.subr.mxu0 0.0
    %633 = vmatpush1.msra.mxu0 0.0
    %634 = vmatprep.subr.mxu0 0.0
    %635 = vmatpush1.msra.mxu0 0.0
    %636 = vmatprep.subr.mxu0 0.0
    %637 = vmatpush1.msra.mxu0 0.0
    %638 = vmatprep.subr.mxu0 0.0
    %639 = vmatpush1.msra.mxu0 0.0
    %640 = vmatprep.subr.mxu0 0.0
    %641 = vmatpush1.msra.mxu0 0.0
    %642 = vmatprep.subr.mxu0 0.0
    %643 = vmatpush1.msra.mxu0 0.0
    %644 = vmatprep.subr.mxu0 0.0
    %645 = vmatpush1.msra.mxu0 0.0
    %646 = vmatprep.subr.mxu0 0.0
    %647 = vmatpush1.msra.mxu0 0.0
    %648 = vmatprep.subr.mxu0 0.0
    %649 = vmatpush1.msra.mxu0 0.0
    %650 = vmatprep.subr.mxu0 0.0
    %651 = vmatpush1.msra.mxu0 0.0
    %652 = vmatprep.subr.mxu0 0.0
    %653 = vmatpush1.msra.mxu0 0.0
    %654 = vmatprep.subr.mxu0 0.0
    %655 = vmatpush1.msra.mxu0 0.0
    %656 = vmatprep.subr.mxu0 0.0
    %657 = vmatpush1.msra.mxu0 0.0
    %658 = vmatprep.subr.mxu0 0.0
    %659 = vmatpush1.msra.mxu0 0.0
    %660 = vmatprep.subr.mxu0 0.0
    %661 = vmatpush1.msra.mxu0 0.0
    %662 = vmatprep.subr.mxu0 0.0
    %663 = vmatpush1.msra.mxu0 0.0
    %664 = vmatprep.subr.mxu0 0.0
    %665 = vmatpush1.msra.mxu0 0.0
    %666 = vmatprep.subr.mxu0 0.0
    %667 = vmatpush1.msra.mxu0 0.0
    %668 = vmatprep.subr.mxu0 0.0
    %669 = vmatpush1.msra.mxu0 0.0
    %670 = vmatprep.subr.mxu0 0.0
    %671 = vmatpush1.msra.mxu0 0.0
    %672 = vmatprep.subr.mxu0 0.0
    %673 = vmatpush1.msra.mxu0 0.0
    %674 = vmatprep.subr.mxu0 0.0
    %675 = vmatpush1.msra.mxu0 0.0
    %676 = vmatprep.subr.mxu0 0.0
    %677 = vmatpush1.msra.mxu0 0.0
    %678 = vmatprep.subr.mxu0 0.0
    %679 = vmatpush1.msra.mxu0 0.0
    %680 = vmatprep.subr.mxu0 0.0
    %681 = vmatpush1.msra.mxu0 0.0
    %682 = vmatprep.subr.mxu0 0.0
    %683 = vmatpush1.msra.mxu0 0.0
    %684 = vmatprep.mubr.f32.mxu0 0.0
    %685 = vmatmul.mubr.f32.gmra.mrb[0].mxu0 %v618
    %v686 = vpop.f32.mrb[0].mxu0
    %v687 = vadd.f32 0.0, %v686
    %v688 = vpop.f32.mrb[0].mxu0
    %689 = vdwg.mxu0
    %v690 = vadd.f32 %v617, %v687
    %v691 = vxor.u32 %v690, 2147483648
    %v692 = vmul.f32 %v691, 1.442695
    %v693 = vpow.pop %v692
    %v694 = vadd.f32 %v693, 1.0
    %v695 = vrcp.pop %v694
    %v696 = vmul.f32 1.0, %v695
    %v697 = vadd.f32 %v687, %v158
    %699 = vrot.lane.b32.xlu0 %v697, 64
    %v700 = vpop.permute.xlu0 %699
    %v702 = vmul.f32 %v696, %v700
    %704 = vrot.lane.b32.xlu0 %v702, 64
    %v705 = vpop.permute.xlu0 %704
    %v707 = vadd.f32 %v617, %v705
    %v708 = vtanh.pop %v707
    %v709 = vsub.f32 1.0, %v696
    %711 = vrot.lane.b32.xlu0 %v708, 96
    %v712 = vpop.permute.xlu0 %711
    %v714 = vmul.f32 %v709, %v712
    %v715 = vmul.f32 %v696, %v609
    %v716 = vadd.f32 %v714, %v715
    %718 = vrot.lane.b32.xlu0 %v716, 96
    %v719 = vpop.permute.xlu0 %718
    %s721 = scalar_lea.vmem [#allocation9], 40
    %722 = vst.msk [vmem:[%s721] sm:$0xff] %vm71, %v719
    %s723 = scalar_lea.vmem [#allocation6], 48
    %v724 = vld [vmem:[%s723] sm:$0xff]
    %v725 = vsel %vm71, %v719, 0
    %727 = vmatprep.subr.mxu0 0.0
    %728 = vmatpush1.msra.mxu0 %v64
    %729 = vmatprep.subr.mxu0 0.0
    %730 = vmatpush1.msra.mxu0 %v65
    %731 = vmatprep.subr.mxu0 0.0
    %732 = vmatpush1.msra.mxu0 %v66
    %733 = vmatprep.subr.mxu0 0.0
    %734 = vmatpush1.msra.mxu0 %v67
    %735 = vmatprep.subr.mxu0 0.0
    %736 = vmatpush1.msra.mxu0 0.0
    %737 = vmatprep.subr.mxu0 0.0
    %738 = vmatpush1.msra.mxu0 0.0
    %739 = vmatprep.subr.mxu0 0.0
    %740 = vmatpush1.msra.mxu0 0.0
    %741 = vmatprep.subr.mxu0 0.0
    %742 = vmatpush1.msra.mxu0 0.0
    %743 = vmatprep.subr.mxu0 0.0
    %744 = vmatpush1.msra.mxu0 0.0
    %745 = vmatprep.subr.mxu0 0.0
    %746 = vmatpush1.msra.mxu0 0.0
    %747 = vmatprep.subr.mxu0 0.0
    %748 = vmatpush1.msra.mxu0 0.0
    %749 = vmatprep.subr.mxu0 0.0
    %750 = vmatpush1.msra.mxu0 0.0
    %751 = vmatprep.subr.mxu0 0.0
    %752 = vmatpush1.msra.mxu0 0.0
    %753 = vmatprep.subr.mxu0 0.0
    %754 = vmatpush1.msra.mxu0 0.0
    %755 = vmatprep.subr.mxu0 0.0
    %756 = vmatpush1.msra.mxu0 0.0
    %757 = vmatprep.subr.mxu0 0.0
    %758 = vmatpush1.msra.mxu0 0.0
    %759 = vmatprep.subr.mxu0 0.0
    %760 = vmatpush1.msra.mxu0 0.0
    %761 = vmatprep.subr.mxu0 0.0
    %762 = vmatpush1.msra.mxu0 0.0
    %763 = vmatprep.subr.mxu0 0.0
    %764 = vmatpush1.msra.mxu0 0.0
    %765 = vmatprep.subr.mxu0 0.0
    %766 = vmatpush1.msra.mxu0 0.0
    %767 = vmatprep.subr.mxu0 0.0
    %768 = vmatpush1.msra.mxu0 0.0
    %769 = vmatprep.subr.mxu0 0.0
    %770 = vmatpush1.msra.mxu0 0.0
    %771 = vmatprep.subr.mxu0 0.0
    %772 = vmatpush1.msra.mxu0 0.0
    %773 = vmatprep.subr.mxu0 0.0
    %774 = vmatpush1.msra.mxu0 0.0
    %775 = vmatprep.subr.mxu0 0.0
    %776 = vmatpush1.msra.mxu0 0.0
    %777 = vmatprep.subr.mxu0 0.0
    %778 = vmatpush1.msra.mxu0 0.0
    %779 = vmatprep.subr.mxu0 0.0
    %780 = vmatpush1.msra.mxu0 0.0
    %781 = vmatprep.subr.mxu0 0.0
    %782 = vmatpush1.msra.mxu0 0.0
    %783 = vmatprep.subr.mxu0 0.0
    %784 = vmatpush1.msra.mxu0 0.0
    %785 = vmatprep.subr.mxu0 0.0
    %786 = vmatpush1.msra.mxu0 0.0
    %787 = vmatprep.subr.mxu0 0.0
    %788 = vmatpush1.msra.mxu0 0.0
    %789 = vmatprep.subr.mxu0 0.0
    %790 = vmatpush1.msra.mxu0 0.0
    %791 = vmatprep.mubr.f32.mxu0 0.0
    %792 = vmatmul.mubr.f32.gmra.mrb[0].mxu0 %v725
    %v793 = vpop.f32.mrb[0].mxu0
    %v794 = vadd.f32 0.0, %v793
    %v795 = vpop.f32.mrb[0].mxu0
    %796 = vdwg.mxu0
    %v797 = vadd.f32 %v724, %v794
    %v798 = vxor.u32 %v797, 2147483648
    %v799 = vmul.f32 %v798, 1.442695
    %v800 = vpow.pop %v799
    %v801 = vadd.f32 %v800, 1.0
    %v802 = vrcp.pop %v801
    %v803 = vmul.f32 1.0, %v802
    %v804 = vadd.f32 %v794, %v158
    %806 = vrot.lane.b32.xlu0 %v804, 64
    %v807 = vpop.permute.xlu0 %806
    %v809 = vmul.f32 %v803, %v807
    %811 = vrot.lane.b32.xlu0 %v809, 64
    %v812 = vpop.permute.xlu0 %811
    %v814 = vadd.f32 %v724, %v812
    %v815 = vtanh.pop %v814
    %v816 = vsub.f32 1.0, %v803
    %818 = vrot.lane.b32.xlu0 %v815, 96
    %v819 = vpop.permute.xlu0 %818
    %v821 = vmul.f32 %v816, %v819
    %v822 = vmul.f32 %v803, %v716
    %v823 = vadd.f32 %v821, %v822
    %825 = vrot.lane.b32.xlu0 %v823, 96
    %v826 = vpop.permute.xlu0 %825
    %s828 = scalar_lea.vmem [#allocation9], 48
    %829 = vst.msk [vmem:[%s828] sm:$0xff] %vm71, %v826
    %s830 = scalar_lea.vmem [#allocation6], 56
    %v831 = vld [vmem:[%s830] sm:$0xff]
    %v832 = vsel %vm71, %v826, 0
    %834 = vmatprep.subr.mxu0 0.0
    %835 = vmatpush1.msra.mxu0 %v64
    %836 = vmatprep.subr.mxu0 0.0
    %837 = vmatpush1.msra.mxu0 %v65
    %838 = vmatprep.subr.mxu0 0.0
    %839 = vmatpush1.msra.mxu0 %v66
    %840 = vmatprep.subr.mxu0 0.0
    %841 = vmatpush1.msra.mxu0 %v67
    %842 = vmatprep.subr.mxu0 0.0
    %843 = vmatpush1.msra.mxu0 0.0
    %844 = vmatprep.subr.mxu0 0.0
    %845 = vmatpush1.msra.mxu0 0.0
    %846 = vmatprep.subr.mxu0 0.0
    %847 = vmatpush1.msra.mxu0 0.0
    %848 = vmatprep.subr.mxu0 0.0
    %849 = vmatpush1.msra.mxu0 0.0
    %850 = vmatprep.subr.mxu0 0.0
    %851 = vmatpush1.msra.mxu0 0.0
    %852 = vmatprep.subr.mxu0 0.0
    %853 = vmatpush1.msra.mxu0 0.0
    %854 = vmatprep.subr.mxu0 0.0
    %855 = vmatpush1.msra.mxu0 0.0
    %856 = vmatprep.subr.mxu0 0.0
    %857 = vmatpush1.msra.mxu0 0.0
    %858 = vmatprep.subr.mxu0 0.0
    %859 = vmatpush1.msra.mxu0 0.0
    %860 = vmatprep.subr.mxu0 0.0
    %861 = vmatpush1.msra.mxu0 0.0
    %862 = vmatprep.subr.mxu0 0.0
    %863 = vmatpush1.msra.mxu0 0.0
    %864 = vmatprep.subr.mxu0 0.0
    %865 = vmatpush1.msra.mxu0 0.0
    %866 = vmatprep.subr.mxu0 0.0
    %867 = vmatpush1.msra.mxu0 0.0
    %868 = vmatprep.subr.mxu0 0.0
    %869 = vmatpush1.msra.mxu0 0.0
    %870 = vmatprep.subr.mxu0 0.0
    %871 = vmatpush1.msra.mxu0 0.0
    %872 = vmatprep.subr.mxu0 0.0
    %873 = vmatpush1.msra.mxu0 0.0
    %874 = vmatprep.subr.mxu0 0.0
    %875 = vmatpush1.msra.mxu0 0.0
    %876 = vmatprep.subr.mxu0 0.0
    %877 = vmatpush1.msra.mxu0 0.0
    %878 = vmatprep.subr.mxu0 0.0
    %879 = vmatpush1.msra.mxu0 0.0
    %880 = vmatprep.subr.mxu0 0.0
    %881 = vmatpush1.msra.mxu0 0.0
    %882 = vmatprep.subr.mxu0 0.0
    %883 = vmatpush1.msra.mxu0 0.0
    %884 = vmatprep.subr.mxu0 0.0
    %885 = vmatpush1.msra.mxu0 0.0
    %886 = vmatprep.subr.mxu0 0.0
    %887 = vmatpush1.msra.mxu0 0.0
    %888 = vmatprep.subr.mxu0 0.0
    %889 = vmatpush1.msra.mxu0 0.0
    %890 = vmatprep.subr.mxu0 0.0
    %891 = vmatpush1.msra.mxu0 0.0
    %892 = vmatprep.subr.mxu0 0.0
    %893 = vmatpush1.msra.mxu0 0.0
    %894 = vmatprep.subr.mxu0 0.0
    %895 = vmatpush1.msra.mxu0 0.0
    %896 = vmatprep.subr.mxu0 0.0
    %897 = vmatpush1.msra.mxu0 0.0
    %898 = vmatprep.mubr.f32.mxu0 0.0
    %899 = vmatmul.mubr.f32.gmra.mrb[0].mxu0 %v832
    %v900 = vpop.f32.mrb[0].mxu0
    %v901 = vadd.f32 0.0, %v900
    %v902 = vpop.f32.mrb[0].mxu0
    %903 = vdwg.mxu0
    %v904 = vadd.f32 %v831, %v901
    %v905 = vxor.u32 %v904, 2147483648
    %v906 = vmul.f32 %v905, 1.442695
    %v907 = vpow.pop %v906
    %v908 = vadd.f32 %v907, 1.0
    %v909 = vrcp.pop %v908
    %v910 = vmul.f32 1.0, %v909
    %v911 = vadd.f32 %v901, %v158
    %913 = vrot.lane.b32.xlu0 %v911, 64
    %v914 = vpop.permute.xlu0 %913
    %v916 = vmul.f32 %v910, %v914
    %918 = vrot.lane.b32.xlu0 %v916, 64
    %v919 = vpop.permute.xlu0 %918
    %v921 = vadd.f32 %v831, %v919
    %v922 = vtanh.pop %v921
    %v923 = vsub.f32 1.0, %v910
    %925 = vrot.lane.b32.xlu0 %v922, 96
    %v926 = vpop.permute.xlu0 %925
    %v928 = vmul.f32 %v923, %v926
    %v929 = vmul.f32 %v910, %v823
    %v930 = vadd.f32 %v928, %v929
    %932 = vrot.lane.b32.xlu0 %v930, 96
    %v933 = vpop.permute.xlu0 %932
    %s935 = scalar_lea.vmem [#allocation9], 56
    %936 = vst.msk [vmem:[%s935] sm:$0xff] %vm71, %v933
    %937 = vst.msk [vmem:[#allocation2] sm:$0xff] %vm71, %v933
    // Predicated region
    $region34: #{tpu_custom_call.1} parent=1 // pred_check
      _
    $region35: #{tpu_custom_call.1} parent=1 // pred_check_branch
      %939 = sbr.rel (0) target = $region37
    $region36: #{tpu_custom_call.1} parent=1 // pred_region
      %s941 = ssub.s32 1024, 1024
      %942 = vsyncadd [#allocation5], %s941
      %s943 = sshll.u32 [#allocation9], 4
      %s944 = int_to_ptr.vmem [resolvable:$true] %s943
      %949 = dma.vmem_to_hbm [thread:$0]  %s944, 1024, %s4, [#allocation5], 128, 128, 8
    $region37: #{tpu_custom_call.1} parent=1 // pred_fallthru
      _
    // Predicated region
    $region38: #{tpu_custom_call.1} parent=1 // pred_check
      _
    $region39: #{tpu_custom_call.1} parent=1 // pred_check_branch
      %951 = sbr.rel (0) target = $region41
    $region40: #{tpu_custom_call.1} parent=1 // pred_region
      %952 = dma.done [#allocation5], 1024
    $region41: #{tpu_custom_call.1} parent=1 // pred_fallthru
      _
    %953 = vsyncpa [#allocation4], 1
    %954 = vsyncpa [#allocation7], 1
    %955 = vsyncpa [#allocation5], 1

</llo_original>
